<compile_context>
chip_gen: v7x
topology: tpu7x:2x2x1
jax: 0.10.0
libtpu: 0.0.40
codegen_flags: <defaults>
</compile_context>

<pallas_src>
import functools

import jax
import jax.numpy as jnp
from jax.experimental import pallas as pl
from jax.experimental.pallas import tpu as pltpu

EPS = 1e-5
_LANES = 128


# ---------------------------------------------------------------------------
# Generation-aware tuning helpers
# ---------------------------------------------------------------------------
def _round_up(n, m):
    return -(-n // m) * m


def _sublane(itemsize):
    # sublane packing granularity: 8 rows f32, 16 bf16, 32 int8
    return max(8, 32 // max(1, itemsize))


def _tpu_tuning(itemsize):
    """Return (per-block byte target, scoped-VMEM limit) for this TPU generation."""
    try:
        vmem = pltpu.get_tpu_info().vmem_capacity_bytes
    except Exception:
        vmem = 128 << 20                      # fall back to the roomier chips
    if vmem <= (64 << 20):
        limit = 32 << 20                      # v7x: 64 MiB physical VMEM, 3.2 TB/s HBM
    else:
        limit = 48 << 20                      # v5e/v6e: 128 MiB VMEM (raise v5e's 16 MiB default)
    # Budget: 2 in + 2 out double-buffered blocks plus ~2 full-block f32 temps
    # (in-kernel upcast) must fit in ~80% of the scoped limit; never below 1 MiB.
    f32_expand = max(1, 4 // max(1, itemsize))
    target = min(4 << 20, (limit * 4 // 5) // (4 + 2 * f32_expand))
    return max(target, 1 << 20), limit


def _pick_block_rows(m, vmem_row_bytes, sub, target_bytes):
    """Rows per block: ~target bytes, sublane-aligned, >=2 grid steps when possible."""
    t = max(sub, (target_bytes // max(1, vmem_row_bytes)) // sub * sub)
    t = min(t, _round_up((m + 1) // 2, sub))  # keep both TensorCores busy (v7x)
    if t >= m:
        return m                              # tiny input: one full-extent block
    return t


def _pick_nchw_blocks(B, C, HW, itemsize, target_bytes):
    """(batch, spatial) block extents for the channel-first kernel."""
    sub = _sublane(itemsize)
    if HW <= _LANES:
        tn = HW                               # full-extent lane block
    else:
        tn_cap = max(_LANES, (target_bytes // max(1, C * itemsize)) // _LANES * _LANES)
        tn = min(tn_cap, (HW // _LANES) * _LANES)
    # VMEM footprint of one block uses sublane/lane padded extents.
    slab = _round_up(C, sub) * _round_up(tn, _LANES) * itemsize
    bb = min(B, max(1, target_bytes // max(1, slab)))
    if HW <= tn and B > 1:                    # single spatial step: keep >=2 batch steps
        bb = min(bb, (B + 1) // 2)
    return bb, tn


# ---------------------------------------------------------------------------
# Kernels
# ---------------------------------------------------------------------------
def _ln_rows_kernel(x_ref, wb_ref, o_ref):
    """Normalize each row of a (tm, C) tile over C (lane axis). One-pass stats."""
    x = x_ref[...].astype(jnp.float32)
    w = wb_ref[0, :]                          # (C,) f32
    b = wb_ref[1, :]
    inv_c = 1.0 / x.shape[-1]
    s1 = jnp.sum(x, axis=-1, keepdims=True)
    s2 = jnp.sum(x * x, axis=-1, keepdims=True)
    mu = s1 * inv_c
    var = jnp.maximum(s2 * inv_c - mu * mu, 0.0)     # unbiased=False
    inv = jax.lax.rsqrt(var + EPS)
    o_ref[...] = ((x - mu) * inv * w + b).astype(o_ref.dtype)


def _ln_packed_kernel(x_ref, seg_ref, wb_ref, o_ref, *, c):
    """Lane-dense small-C kernel: 128//c tokens per 128-lane row.

    Per-token (segment-of-c-lanes) sums are computed on the MXU with a
    block-diagonal 0/1 matrix, so the XLU does no cross-lane reduces and every
    load/store uses all 128 lanes.
    """
    x = x_ref[...].astype(jnp.float32)        # (tp, 128)
    seg = seg_ref[...]                        # (128, 128) f32 0/1 segment matrix
    w = wb_ref[0, :]                          # (128,) weight tiled per token slot
    b = wb_ref[1, :]
    inv_c = 1.0 / c
    s1 = jnp.dot(x, seg, preferred_element_type=jnp.float32,
                 precision=jax.lax.Precision.HIGHEST)
    s2 = jnp.dot(x * x, seg, preferred_element_type=jnp.float32,
                 precision=jax.lax.Precision.HIGHEST)
    mu = s1 * inv_c
    var = jnp.maximum(s2 * inv_c - mu * mu, 0.0)
    inv = jax.lax.rsqrt(var + EPS)
    o_ref[...] = ((x - mu) * inv * w + b).astype(o_ref.dtype)


def _ln_channels_kernel(x_ref, wb_ref, o_ref):
    """Normalize a (bb, C, tn) tile over C (sublane axis); pixels are lane-dense."""
    x = x_ref[...].astype(jnp.float32)
    w = wb_ref[0]                             # (C, 1) f32
    b = wb_ref[1]
    inv_c = 1.0 / x.shape[1]
    s1 = jnp.sum(x, axis=1, keepdims=True)
    s2 = jnp.sum(x * x, axis=1, keepdims=True)
    mu = s1 * inv_c
    var = jnp.maximum(s2 * inv_c - mu * mu, 0.0)
    inv = jax.lax.rsqrt(var + EPS)
    o_ref[...] = ((x - mu) * inv * w + b).astype(o_ref.dtype)


# ---------------------------------------------------------------------------
# Internal launchers
# ---------------------------------------------------------------------------
def _ln_rows(x, weight, bias, M, C, target, vmem_limit):
    lead = x.shape[:-1]
    itemsize = x.dtype.itemsize
    x2 = x.reshape(M, C)
    # VMEM pads the lane dim to 128: size blocks by the padded footprint.
    vmem_row_bytes = _round_up(max(C, 1), _LANES) * itemsize
    tm = _pick_block_rows(M, vmem_row_bytes, _sublane(itemsize), target)
    wb = jnp.stack([weight.reshape(C), bias.reshape(C)]).astype(jnp.float32)

    out = pl.pallas_call(
        _ln_rows_kernel,
        out_shape=jax.ShapeDtypeStruct((M, C), x.dtype),
        grid_spec=pltpu.PrefetchScalarGridSpec(
            num_scalar_prefetch=0,
            grid=(pl.cdiv(M, tm),),                       # ragged last tile: masked
            in_specs=[
                pl.BlockSpec((tm, C), lambda i: (i, 0)),  # token tile
                pl.BlockSpec((2, C), lambda i: (0, 0)),   # fused weight+bias (DMA'd once)
            ],
            out_specs=pl.BlockSpec((tm, C), lambda i: (i, 0)),
        ),
        compiler_params=pltpu.CompilerParams(
            dimension_semantics=("parallel",),
            vmem_limit_bytes=vmem_limit),
    )(x2, wb)
    return out.reshape(*lead, C)


def _ln_small_c_packed(x, weight, bias, M, C, target, vmem_limit):
    lead = x.shape[:-1]
    itemsize = x.dtype.itemsize
    P = _LANES // C                                       # tokens per 128-lane row
    Mp = (M * C) // _LANES
    xp = x.reshape(Mp, _LANES)                            # free reshape (contiguous)
    tp = _pick_block_rows(Mp, _LANES * itemsize, _sublane(itemsize), target)

    wb = jnp.tile(jnp.stack([weight.reshape(C), bias.reshape(C)]).astype(jnp.float32),
                  (1, P))                                 # (2, 128) per-token-slot params
    lane = jnp.arange(_LANES)
    seg = (lane[:, None] // C == lane[None, :] // C).astype(jnp.float32)  # (128, 128)

    out = pl.pallas_call(
        functools.partial(_ln_packed_kernel, c=C),
        out_shape=jax.ShapeDtypeStruct((Mp, _LANES), x.dtype),
        grid_spec=pltpu.PrefetchScalarGridSpec(
            num_scalar_prefetch=0,
            grid=(pl.cdiv(Mp, tp),),
            in_specs=[
                pl.BlockSpec((tp, _LANES), lambda i: (i, 0)),
                pl.BlockSpec((_LANES, _LANES), lambda i: (0, 0)),
                pl.BlockSpec((2, _LANES), lambda i: (0, 0)),
            ],
            out_specs=pl.BlockSpec((tp, _LANES), lambda i: (i, 0)),
        ),
        compiler_params=pltpu.CompilerParams(
            dimension_semantics=("parallel",),
            vmem_limit_bytes=vmem_limit),
    )(xp, seg, wb)
    return out.reshape(*lead, C)


# ---------------------------------------------------------------------------
# Public wrappers
# ---------------------------------------------------------------------------
def with_bias_layer_norm(x, weight, bias):
    """LayerNorm over the last axis of x (any leading shape), with weight/bias."""
    C = x.shape[-1]
    lead = x.shape[:-1]
    M = 1
    for d in lead:
        M *= d
    target, vmem_limit = _tpu_tuning(x.dtype.itemsize)

    if C < _LANES and _LANES % C == 0 and (M * C) % _LANES == 0:
        # Small-C fast path: fully lane-dense loads/stores, MXU segmented reduce.
        return _ln_small_c_packed(x, weight, bias, M, C, target, vmem_limit)
    # C >= 128 (lane-dense) or non-dividing C (masked fallback, still correct).
    return _ln_rows(x, weight, bias, M, C, target, vmem_limit)


def with_bias_layer_norm_nchw(x, weight, bias):
    """CPAEhance fast path: x is (B, C, H, W); LayerNorm over C per pixel.

    Equivalent to rearrange-to-(B, H*W, C) -> WithBias_LayerNorm -> rearrange
    back, but fused: the transpose never touches HBM and the stores are
    lane-dense over the spatial axis. Blocks tile over (batch, spatial) so
    small feature maps still issue ~MiB-scale DMAs.
    """
    B, C, H, W = x.shape
    HW = H * W
    x3 = x.reshape(B, C, HW)                              # free reshape (contiguous)
    itemsize = x.dtype.itemsize
    target, vmem_limit = _tpu_tuning(itemsize)
    bb, tn = _pick_nchw_blocks(B, C, HW, itemsize, target)
    wb = jnp.stack([weight.reshape(C), bias.reshape(C)]).astype(jnp.float32).reshape(2, C, 1)

    out = pl.pallas_call(
        _ln_channels_kernel,
        out_shape=jax.ShapeDtypeStruct((B, C, HW), x.dtype),
        grid_spec=pltpu.PrefetchScalarGridSpec(
            num_scalar_prefetch=0,
            grid=(pl.cdiv(B, bb), pl.cdiv(HW, tn)),       # ragged tiles: masked
            in_specs=[
                pl.BlockSpec((bb, C, tn), lambda i, j: (i, 0, j)),   # pixel tile
                pl.BlockSpec((2, C, 1), lambda i, j: (0, 0, 0)),     # fused w+b
            ],
            out_specs=pl.BlockSpec((bb, C, tn), lambda i, j: (i, 0, j)),
        ),
        compiler_params=pltpu.CompilerParams(
            dimension_semantics=("parallel", "parallel"),
            vmem_limit_bytes=vmem_limit),
    )(x3, wb)
    return out.reshape(B, C, H, W)


# ---------------------------------------------------------------------------
# Demo / correctness check
# ---------------------------------------------------------------------------
if __name__ == "__main__":
    key = jax.random.PRNGKey(0)
    k1, k2, k3 = jax.random.split(key, 3)

    B, C, H, W = 2, 32, 16, 16
    x_nchw = jax.random.normal(k1, (B, C, H, W), dtype=jnp.float32)
    weight = 1.0 + 0.1 * jax.random.normal(k2, (C,), dtype=jnp.float32)
    bias = 0.1 * jax.random.normal(k3, (C,), dtype=jnp.float32)

    def ref_ln(t, w, b):   # pure-JAX reference of the torch forward (last-dim norm)
        mu = jnp.mean(t, axis=-1, keepdims=True)
        var = jnp.mean((t - mu) ** 2, axis=-1, keepdims=True)
        return (t - mu) / jnp.sqrt(var + EPS) * w + b

    # Channel-last token layout (as used in CPAEhance before the module call).
    x_tokens = jnp.transpose(x_nchw, (0, 2, 3, 1)).reshape(B, H * W, C)
    ref_tokens = ref_ln(x_tokens, weight, bias)

    # 1) Small-C channel-last tokens -> lane-dense packed kernel (MXU segmented reduce).
    out_tokens = jax.block_until_ready(with_bias_layer_norm(x_tokens, weight, bias))
    assert out_tokens.shape == x_tokens.shape and out_tokens.dtype == x_tokens.dtype
    assert jnp.allclose(out_tokens, ref_tokens, atol=1e-5, rtol=1e-5)

    # 2) Transpose-fused NCHW variant (batch+spatial tiled blocks).
    out_nchw = jax.block_until_ready(with_bias_layer_norm_nchw(x_nchw, weight, bias))
    ref_nchw = jnp.transpose(ref_tokens.reshape(B, H, W, C), (0, 3, 1, 2))
    assert out_nchw.shape == x_nchw.shape and out_nchw.dtype == x_nchw.dtype
    assert jnp.allclose(out_nchw, ref_nchw, atol=1e-5, rtol=1e-5)

    # 3) Token count not divisible by the pack factor -> generic rows fallback.
    x_rag = x_tokens[:, :99, :]                  # M = 198, 198 % 4 != 0
    out_rag = jax.block_until_ready(with_bias_layer_norm(x_rag, weight, bias))
    assert jnp.allclose(out_rag, ref_ln(x_rag, weight, bias), atol=1e-5, rtol=1e-5)

    # 4) C >= 128 exercises the generic (lane-dense) rows kernel directly.
    C2 = 128
    k4, k5, k6 = jax.random.split(jax.random.PRNGKey(1), 3)
    x_big = jax.random.normal(k4, (4, 37, C2), dtype=jnp.float32)
    w2 = 1.0 + 0.1 * jax.random.normal(k5, (C2,), dtype=jnp.float32)
    b2 = 0.1 * jax.random.normal(k6, (C2,), dtype=jnp.float32)
    out_big = jax.block_until_ready(with_bias_layer_norm(x_big, w2, b2))
    assert jnp.allclose(out_big, ref_ln(x_big, w2, b2), atol=1e-5, rtol=1e-5)

    # 5) Ragged spatial extent on the NCHW path (masked last lane tile).
    xn_rag = x_nchw[:, :, :13, :]                # HW = 208, not a multiple of 128
    out_nrag = jax.block_until_ready(with_bias_layer_norm_nchw(xn_rag, weight, bias))
    refn = jnp.transpose(ref_ln(jnp.transpose(xn_rag, (0, 2, 3, 1)), weight, bias),
                         (0, 3, 1, 2))
    assert jnp.allclose(out_nrag, refn, atol=1e-5, rtol=1e-5)

    print("KERNEL_OK")
</pallas_src>

<mosaic_0001>
module attributes {stable_mosaic.version = 11 : i64} {
  func.func @_ln_packed_kernel(%arg0: i32, %arg1: memref<64x128xf32, #tpu.memory_space<vmem>>, %arg2: memref<128x128xf32, #tpu.memory_space<vmem>>, %arg3: memref<2x128xf32, #tpu.memory_space<vmem>>, %arg4: memref<64x128xf32, #tpu.memory_space<vmem>>) attributes {dimension_semantics = [#tpu.dimension_semantics<parallel>], iteration_bounds = array<i64: 2>, scalar_prefetch = 0 : i64, scratch_operands = 0 : i64, tpu.core_type = #tpu.core_type<tc>, window_params = [{transform_indices = @transform_0, window_bounds = array<i64: 64, 128>}, {pipeline_mode = #tpu.pipeline_mode<synchronous>, transform_indices = @transform_1, window_bounds = array<i64: 128, 128>}, {pipeline_mode = #tpu.pipeline_mode<synchronous>, transform_indices = @transform_2, window_bounds = array<i64: 2, 128>}, {transform_indices = @transform_3, window_bounds = array<i64: 64, 128>}]} {
    %c0 = arith.constant 0 : index
    %c0_0 = arith.constant 0 : index
    %0 = vector.load %arg1[%c0, %c0_0] : memref<64x128xf32, #tpu.memory_space<vmem>>, vector<64x128xf32>
    %c0_1 = arith.constant 0 : index
    %c0_2 = arith.constant 0 : index
    %1 = vector.load %arg2[%c0_1, %c0_2] : memref<128x128xf32, #tpu.memory_space<vmem>>, vector<128x128xf32>
    %c0_3 = arith.constant 0 : index
    %c0_4 = arith.constant 0 : index
    %2 = vector.load %arg3[%c0_3, %c0_4] : memref<2x128xf32, #tpu.memory_space<vmem>>, vector<1x128xf32>
    %3 = vector.shape_cast %2 : vector<1x128xf32> to vector<128xf32>
    %c1 = arith.constant 1 : index
    %c0_5 = arith.constant 0 : index
    %4 = vector.load %arg3[%c1, %c0_5] : memref<2x128xf32, #tpu.memory_space<vmem>>, vector<1x128xf32>
    %5 = vector.shape_cast %4 : vector<1x128xf32> to vector<128xf32>
    %cst = arith.constant dense<0.000000e+00> : vector<64x128xf32>
    %6 = tpu.matmul %0, %1, %cst {dimension_numbers = #tpu.dot_dimension_numbers<[1], [0], [0], [1], [0, 0, 1, 1], [], []>, precision = #tpu.contract_precision<fp32>} : vector<64x128xf32>, vector<128x128xf32>, vector<64x128xf32> -> vector<64x128xf32>
    %7 = arith.mulf %0, %0 : vector<64x128xf32>
    %cst_6 = arith.constant dense<0.000000e+00> : vector<64x128xf32>
    %8 = tpu.matmul %7, %1, %cst_6 {dimension_numbers = #tpu.dot_dimension_numbers<[1], [0], [0], [1], [0, 0, 1, 1], [], []>, precision = #tpu.contract_precision<fp32>} : vector<64x128xf32>, vector<128x128xf32>, vector<64x128xf32> -> vector<64x128xf32>
    %cst_7 = arith.constant 3.125000e-02 : f32
    %9 = vector.broadcast %cst_7 : f32 to vector<64x128xf32>
    %10 = arith.mulf %6, %9 : vector<64x128xf32>
    %cst_8 = arith.constant 3.125000e-02 : f32
    %11 = vector.broadcast %cst_8 : f32 to vector<64x128xf32>
    %12 = arith.mulf %8, %11 : vector<64x128xf32>
    %13 = arith.mulf %10, %10 : vector<64x128xf32>
    %14 = arith.subf %12, %13 : vector<64x128xf32>
    %cst_9 = arith.constant 0.000000e+00 : f32
    %15 = vector.broadcast %cst_9 : f32 to vector<64x128xf32>
    %16 = arith.maximumf %14, %15 : vector<64x128xf32>
    %cst_10 = arith.constant 9.99999974E-6 : f32
    %17 = vector.broadcast %cst_10 : f32 to vector<64x128xf32>
    %18 = arith.addf %16, %17 : vector<64x128xf32>
    %19 = math.rsqrt %18 : vector<64x128xf32>
    %20 = arith.subf %0, %10 : vector<64x128xf32>
    %21 = arith.mulf %20, %19 : vector<64x128xf32>
    %22 = vector.shape_cast %3 : vector<128xf32> to vector<1x128xf32>
    %23 = vector.broadcast %22 : vector<1x128xf32> to vector<64x128xf32>
    %24 = arith.mulf %21, %23 : vector<64x128xf32>
    %25 = vector.shape_cast %5 : vector<128xf32> to vector<1x128xf32>
    %26 = vector.broadcast %25 : vector<1x128xf32> to vector<64x128xf32>
    %27 = arith.addf %24, %26 : vector<64x128xf32>
    %c0_11 = arith.constant 0 : index
    %c0_12 = arith.constant 0 : index
    %28 = vector.load %arg4[%c0_11, %c0_12] : memref<64x128xf32, #tpu.memory_space<vmem>>, vector<64x128xf32>
    tpu.vector_store %arg4[%c0_11, %c0_12], %27 {strides = array<i32>} : memref<64x128xf32, #tpu.memory_space<vmem>>, vector<64x128xf32>,
    return
  }
  func.func @transform_0(%arg0: i32) -> (i32, i32) {
    %c0_i32 = arith.constant 0 : i32
    %c0_i32_0 = arith.constant 0 : i32
    return %arg0, %c0_i32 : i32, i32
  }
  func.func @transform_1(%arg0: i32) -> (i32, i32) {
    %c0_i32 = arith.constant 0 : i32
    %c0_i32_0 = arith.constant 0 : i32
    %c0_i32_1 = arith.constant 0 : i32
    return %c0_i32, %c0_i32_0 : i32, i32
  }
  func.func @transform_2(%arg0: i32) -> (i32, i32) {
    %c0_i32 = arith.constant 0 : i32
    %c0_i32_0 = arith.constant 0 : i32
    %c0_i32_1 = arith.constant 0 : i32
    return %c0_i32, %c0_i32_0 : i32, i32
  }
  func.func @transform_3(%arg0: i32) -> (i32, i32) {
    %c0_i32 = arith.constant 0 : i32
    %c0_i32_0 = arith.constant 0 : i32
    return %arg0, %c0_i32 : i32, i32
  }
}

</mosaic_0001>

<llo_original>
// kernel: tpu_custom_call.1
$region0: #{tpu_custom_call.1}
  #allocation0 [shape = 'u32[]', space=smem, size = 0x4, offset = 0x4, fixed_abs, tag = 'smem constant byte address 0x4 - core index']
  #allocation1 [shape = 'u32[144,128]{1,0:T(1,128)}', space=vmem, size = 0x12000, scoped, tag = 'internal scratch']
  %s0 = inlined_call_operand.hbm [shape: f32[128,128], index: 0, kind: input, shape index: {}]
  %s1 = inlined_call_operand.hbm [shape: f32[128,128], index: 1, kind: input, shape index: {}]
  %s2 = inlined_call_operand.vmem [shape: f32[2,128], index: 2, kind: input, shape index: {}]
  %s3 = inlined_call_operand.hbm [shape: f32[128,128], index: 3, kind: output, shape index: {}]
  %s4 = sld [smem:[#allocation0]]
  $region53: #{tpu_custom_call.1} parent=0
    _
  %s6 = ssub.s32 1, %s4
  %s7 = scalar_select 0, %s6, %s4
  $region1: #{tpu_custom_call.1} parent=0
    #allocation2 [shape = 'u8[65536]{0}', space=vmem, size = 0x10000, scoped, tag = 'input window, operand 0']
    #allocation3 [shape = 's32[2]{0}', space=sflag, size = 0x8, scoped, tag = 'scoped memory for tpu_custom_call.1']
    #allocation4 [shape = 's32[2]{0}', space=sflag, size = 0x8, scoped, tag = 'scoped memory for tpu_custom_call.1']
    #allocation5 [shape = 'u8[65536]{0}', space=vmem, size = 0x10000, scoped, tag = 'input window, operand 1, single buffered']
    #allocation6 [shape = 's32[1]{0}', space=sflag, size = 0x4, scoped, tag = 'scoped memory for tpu_custom_call.1']
    #allocation7 [shape = 'u8[65536]{0}', space=vmem, size = 0x10000, scoped, tag = 'output window, operand 0']
    %8 = vsyncpa [#allocation3], 0
    %s9 = scalar_lea.sflag [#allocation3], 1
    %10 = vsyncpa %s9, 0
    %11 = vsyncpa [#allocation6], 0
    %12 = vsyncpa [#allocation4], 0
    %s13 = scalar_lea.sflag [#allocation4], 1
    %14 = vsyncpa %s13, 0
    loop: start=0, step=1, limit=4
    $region2: #{tpu_custom_call.1} parent=1 // loop_pre_header
      _
    $region3: #{tpu_custom_call.1} parent=1 // loop_header
      %s16 = sphi 0, %s20
      %p17 = scmp.ge.s32.totalorder %s16, 4
      %s26 = sphi 0, %s28
      %s29 = sphi 0, %s26
      %s30 = sphi 0, %s29
      %s46 = sphi 0, %s30
      %s50 = sphi 0, %s50
      %s52 = sphi 0, %s50
      %s53 = sphi 0, %s52
      %s67 = sphi 0, %s53
      %s71 = sphi 0, %s71
      %s73 = sphi 0, %s71
      %s74 = sphi 0, %s73
      %s88 = sphi 0, %s74
      %s94 = sphi 0, %s96
      %s97 = sphi 0, %s94
      %s98 = sphi 0, %s97
      %s114 = sphi 0, %s98
    $region4: #{tpu_custom_call.1} parent=1 // loop_header_branch
      %19 = sbr.rel (%p17) target = $region8
    $region5: #{tpu_custom_call.1} parent=1 // loop_body
      %s21 = ssub.s32 %s16, 1
      %s22 = ssub.s32 %s16, 2
      %s23 = sadd.s32 %s16, 1
      %s24 = ssub.s32 %s16, %s23
      %p25 = scmp.eq.s32.totalorder %s24, 0
      %s27 = sadd.s32 %s26, 1
      %s28 = scalar_select %p25, %s26, %s27
      %p31 = pneg %p25
      %p32 = scmp.eq.s32.totalorder %s16, 1
      %p33 = por %p31, %p32
      %p34 = scmp.ne.s32.totalorder %s26, %s29
      %p35 = scmp.eq.s32.totalorder %s16, 0
      %p36 = por %p34, %p35
      %p37 = scmp.ne.s32.totalorder %s26, %s29
      %p38 = scmp.eq.s32.totalorder %s21, 1
      %p39 = por %p37, %p38
      %p40 = scmp.ne.s32.totalorder %s29, %s30
      %p41 = scmp.eq.s32.totalorder %s21, 0
      %p42 = por %p40, %p41
      %p43 = scmp.ne.s32.totalorder %s29, %s30
      %p44 = scmp.eq.s32.totalorder %s22, 1
      %p45 = por %p43, %p44
      %p47 = scmp.ne.s32.totalorder %s30, %s46
      %p48 = scmp.eq.s32.totalorder %s22, 0
      %p49 = por %p47, %p48
      %s51 = sadd.s32 %s50, 1
      %p54 = scmp.eq.s32.totalorder %s16, 1
      %p55 = scmp.ne.s32.totalorder %s50, %s52
      %p56 = scmp.eq.s32.totalorder %s16, 0
      %p57 = por %p55, %p56
      %p58 = scmp.ne.s32.totalorder %s50, %s52
      %p59 = scmp.eq.s32.totalorder %s21, 1
      %p60 = por %p58, %p59
      %p61 = scmp.ne.s32.totalorder %s52, %s53
      %p62 = scmp.eq.s32.totalorder %s21, 0
      %p63 = por %p61, %p62
      %p64 = scmp.ne.s32.totalorder %s52, %s53
      %p65 = scmp.eq.s32.totalorder %s22, 1
      %p66 = por %p64, %p65
      %p68 = scmp.ne.s32.totalorder %s53, %s67
      %p69 = scmp.eq.s32.totalorder %s22, 0
      %p70 = por %p68, %p69
      %s72 = sadd.s32 %s71, 1
      %p75 = scmp.eq.s32.totalorder %s16, 1
      %p76 = scmp.ne.s32.totalorder %s71, %s73
      %p77 = scmp.eq.s32.totalorder %s16, 0
      %p78 = por %p76, %p77
      %p79 = scmp.ne.s32.totalorder %s71, %s73
      %p80 = scmp.eq.s32.totalorder %s21, 1
      %p81 = por %p79, %p80
      %p82 = scmp.ne.s32.totalorder %s73, %s74
      %p83 = scmp.eq.s32.totalorder %s21, 0
      %p84 = por %p82, %p83
      %p85 = scmp.ne.s32.totalorder %s73, %s74
      %p86 = scmp.eq.s32.totalorder %s22, 1
      %p87 = por %p85, %p86
      %p89 = scmp.ne.s32.totalorder %s74, %s88
      %p90 = scmp.eq.s32.totalorder %s22, 0
      %p91 = por %p89, %p90
      %s92 = ssub.s32 %s16, %s23
      %p93 = scmp.eq.s32.totalorder %s92, 0
      %s95 = sadd.s32 %s94, 1
      %s96 = scalar_select %p93, %s94, %s95
      %p99 = pneg %p93
      %p100 = scmp.eq.s32.totalorder %s16, 1
      %p101 = por %p99, %p100
      %p102 = scmp.ne.s32.totalorder %s94, %s97
      %p103 = scmp.eq.s32.totalorder %s16, 0
      %p104 = por %p102, %p103
      %p105 = scmp.ne.s32.totalorder %s94, %s97
      %p106 = scmp.eq.s32.totalorder %s21, 1
      %p107 = por %p105, %p106
      %p108 = scmp.ne.s32.totalorder %s97, %s98
      %p109 = scmp.eq.s32.totalorder %s21, 0
      %p110 = por %p108, %p109
      %p111 = scmp.ne.s32.totalorder %s97, %s98
      %p112 = scmp.eq.s32.totalorder %s22, 1
      %p113 = por %p111, %p112
      %p115 = scmp.ne.s32.totalorder %s98, %s114
      %p116 = scmp.eq.s32.totalorder %s22, 0
      %p117 = por %p115, %p116
      %p118 = scmp.le.s32.totalorder 1, %s16
      %p119 = scmp.lt.s32.totalorder %s16, 3
      %p120 = pnand %p118, %p119
      %p121 = pneg %p120
      // Predicated region
      $region9: #{tpu_custom_call.1} parent=5 // pred_check
        _
      $region10: #{tpu_custom_call.1} parent=5 // pred_check_branch
        %123 = sbr.rel (%p120) target = $region12
      $region11: #{tpu_custom_call.1} parent=5 // pred_region
        %s124 = ssub.s32 %s16, 1
        // Predicated region
        $region13: #{tpu_custom_call.1} parent=11 // pred_check
          %p125 = pneg %p63
        $region14: #{tpu_custom_call.1} parent=11 // pred_check_branch
          %127 = sbr.rel (%p125) target = $region16
        $region15: #{tpu_custom_call.1} parent=11 // pred_region
          %s129 = ssub.s32 2048, 2048
          %130 = vsyncadd [#allocation6], %s129
          %s131 = sshll.u32 [#allocation5], 4
          %s132 = int_to_ptr.vmem [resolvable:$true] %s131
          %137 = dma.hbm_to_vmem [thread:$0]  %s1, 2048, %s132, [#allocation6], 128, 128, 8
        $region16: #{tpu_custom_call.1} parent=11 // pred_fallthru
          _
        // Predicated region
        $region17: #{tpu_custom_call.1} parent=11 // pred_check
          %p138 = pneg %p84
        $region18: #{tpu_custom_call.1} parent=11 // pred_check_branch
          %140 = sbr.rel (%p138) target = $region20
        $region19: #{tpu_custom_call.1} parent=11 // pred_region
          _
        $region20: #{tpu_custom_call.1} parent=11 // pred_fallthru
          _
      $region12: #{tpu_custom_call.1} parent=5 // pred_fallthru
        _
      %p141 = scmp.lt.s32.totalorder %s16, 2
      // Predicated region
      $region21: #{tpu_custom_call.1} parent=5 // pred_check
        %p142 = pneg %p141
      $region22: #{tpu_custom_call.1} parent=5 // pred_check_branch
        %144 = sbr.rel (%p142) target = $region24
      $region23: #{tpu_custom_call.1} parent=5 // pred_region
        // Predicated region
        $region25: #{tpu_custom_call.1} parent=23 // pred_check
          %p145 = pneg %p36
        $region26: #{tpu_custom_call.1} parent=23 // pred_check_branch
          %147 = sbr.rel (%p145) target = $region28
        $region27: #{tpu_custom_call.1} parent=23 // pred_region
          %s148 = sand.u32 %s26, 1
          %s149 = scalar_lea.sflag [#allocation3], %s148
          %s150 = sand.u32 %s26, 1
          %s151 = smul.addr %s150, 64
          %s152 = scalar_lea.vmem [#allocation2], %s151
          %s153 = smul.u32 8, %s16
          %s155 = ssub.s32 1024, 1024
          %156 = vsyncadd %s149, %s155
          %s157 = smul.addr %s153, 128
          %s158 = scalar_lea.hbm %s0, %s157
          %s159 = sshll.u32 %s152, 4
          %s160 = int_to_ptr.vmem [resolvable:$true] %s159
          %165 = dma.hbm_to_vmem [thread:$0]  %s158, 1024, %s160, %s149, 128, 128, 8
        $region28: #{tpu_custom_call.1} parent=23 // pred_fallthru
          _
      $region24: #{tpu_custom_call.1} parent=5 // pred_fallthru
        _
      %p166 = scmp.le.s32.totalorder 1, %s16
      %p167 = scmp.lt.s32.totalorder %s16, 3
      %p168 = pnand %p166, %p167
      %p169 = pneg %p168
      // Predicated region
      $region29: #{tpu_custom_call.1} parent=5 // pred_check
        _
      $region30: #{tpu_custom_call.1} parent=5 // pred_check_branch
        %171 = sbr.rel (%p168) target = $region32
      $region31: #{tpu_custom_call.1} parent=5 // pred_region
        %s172 = ssub.s32 %s16, 1
        %s173 = sand.u32 %s29, 1
        %s174 = scalar_lea.sflag [#allocation3], %s173
        %s175 = sand.u32 %s29, 1
        %s176 = smul.addr %s175, 64
        %s177 = scalar_lea.vmem [#allocation2], %s176
        // Predicated region
        $region33: #{tpu_custom_call.1} parent=31 // pred_check
          %p178 = pneg %p42
        $region34: #{tpu_custom_call.1} parent=31 // pred_check_branch
          %180 = sbr.rel (%p178) target = $region36
        $region35: #{tpu_custom_call.1} parent=31 // pred_region
          %181 = dma.done %s174, 1024
        $region36: #{tpu_custom_call.1} parent=31 // pred_fallthru
          _
        // Predicated region
        $region37: #{tpu_custom_call.1} parent=31 // pred_check
          %p182 = pneg %p63
        $region38: #{tpu_custom_call.1} parent=31 // pred_check_branch
          %184 = sbr.rel (%p182) target = $region40
        $region39: #{tpu_custom_call.1} parent=31 // pred_region
          %185 = dma.done [#allocation6], 2048
        $region40: #{tpu_custom_call.1} parent=31 // pred_fallthru
          _
        %s186 = sand.u32 %s29, 1
        %s187 = scalar_lea.sflag [#allocation3], %s186
        %s188 = sand.u32 %s29, 1
        %s189 = smul.addr %s188, 64
        %s190 = scalar_lea.vmem [#allocation2], %s189
        %p191 = pneg %p42
        %p192 = pneg %p39
        %p193 = pneg %p63
        %p194 = pneg %p60
        %p195 = pneg %p84
        %p196 = pneg %p81
        %p197 = pneg %p110
        %p198 = pneg %p107
        %s199 = sand.u32 %s97, 1
        %s200 = scalar_lea.sflag [#allocation4], %s199
        %s201 = sand.u32 %s97, 1
        %s202 = smul.addr %s201, 64
        %s203 = scalar_lea.vmem [#allocation7], %s202
        %s204 = smul.u32 8, %s21
        %s205 = smul.u32 8, %s21
        %v206 = vld [vmem:[%s177] sm:$0xff]
        %v207 = vld [vmem:[%s177 + $0x8] sm:$0xff]
        %v208 = vld [vmem:[%s177 + $0x10] sm:$0xff]
        %v209 = vld [vmem:[%s177 + $0x18] sm:$0xff]
        %v210 = vld [vmem:[%s177 + $0x20] sm:$0xff]
        %v211 = vld [vmem:[%s177 + $0x28] sm:$0xff]
        %v212 = vld [vmem:[%s177 + $0x30] sm:$0xff]
        %v213 = vld [vmem:[%s177 + $0x38] sm:$0xff]
        %v214 = vld [vmem:[#allocation5] sm:$0xff]
        %v215 = vld [vmem:[#allocation5 + $0x8] sm:$0xff]
        %v216 = vld [vmem:[#allocation5 + $0x10] sm:$0xff]
        %v217 = vld [vmem:[#allocation5 + $0x18] sm:$0xff]
        %v218 = vld [vmem:[#allocation5 + $0x20] sm:$0xff]
        %v219 = vld [vmem:[#allocation5 + $0x28] sm:$0xff]
        %v220 = vld [vmem:[#allocation5 + $0x30] sm:$0xff]
        %v221 = vld [vmem:[#allocation5 + $0x38] sm:$0xff]
        %v222 = vld [vmem:[#allocation5 + $0x40] sm:$0xff]
        %v223 = vld [vmem:[#allocation5 + $0x48] sm:$0xff]
        %v224 = vld [vmem:[#allocation5 + $0x50] sm:$0xff]
        %v225 = vld [vmem:[#allocation5 + $0x58] sm:$0xff]
        %v226 = vld [vmem:[#allocation5 + $0x60] sm:$0xff]
        %v227 = vld [vmem:[#allocation5 + $0x68] sm:$0xff]
        %v228 = vld [vmem:[#allocation5 + $0x70] sm:$0xff]
        %v229 = vld [vmem:[#allocation5 + $0x78] sm:$0xff]
        %v230 = vld [vmem:[%s2] sm:$0x1]
        %v231 = vld [vmem:[%s2 + $0x1] sm:$0x1]
        %232 = vmatprep.subr.mxu0 0.0
        %v233 = vand.u32 %v214, 4294901760
        %234 = vmatpush1.msra.mxu0 %v233
        %235 = vmatprep.subr.mxu0 0.0
        %v236 = vand.u32 %v215, 4294901760
        %237 = vmatpush1.msra.mxu0 %v236
        %238 = vmatprep.subr.mxu0 0.0
        %v239 = vand.u32 %v216, 4294901760
        %240 = vmatpush1.msra.mxu0 %v239
        %241 = vmatprep.subr.mxu0 0.0
        %v242 = vand.u32 %v217, 4294901760
        %243 = vmatpush1.msra.mxu0 %v242
        %244 = vmatprep.subr.mxu0 0.0
        %v245 = vand.u32 %v218, 4294901760
        %246 = vmatpush1.msra.mxu0 %v245
        %247 = vmatprep.subr.mxu0 0.0
        %v248 = vand.u32 %v219, 4294901760
        %249 = vmatpush1.msra.mxu0 %v248
        %250 = vmatprep.subr.mxu0 0.0
        %v251 = vand.u32 %v220, 4294901760
        %252 = vmatpush1.msra.mxu0 %v251
        %253 = vmatprep.subr.mxu0 0.0
        %v254 = vand.u32 %v221, 4294901760
        %255 = vmatpush1.msra.mxu0 %v254
        %256 = vmatprep.subr.mxu0 0.0
        %v257 = vand.u32 %v222, 4294901760
        %258 = vmatpush1.msra.mxu0 %v257
        %259 = vmatprep.subr.mxu0 0.0
        %v260 = vand.u32 %v223, 4294901760
        %261 = vmatpush1.msra.mxu0 %v260
        %262 = vmatprep.subr.mxu0 0.0
        %v263 = vand.u32 %v224, 4294901760
        %264 = vmatpush1.msra.mxu0 %v263
        %265 = vmatprep.subr.mxu0 0.0
        %v266 = vand.u32 %v225, 4294901760
        %267 = vmatpush1.msra.mxu0 %v266
        %268 = vmatprep.subr.mxu0 0.0
        %v269 = vand.u32 %v226, 4294901760
        %270 = vmatpush1.msra.mxu0 %v269
        %271 = vmatprep.subr.mxu0 0.0
        %v272 = vand.u32 %v227, 4294901760
        %273 = vmatpush1.msra.mxu0 %v272
        %274 = vmatprep.subr.mxu0 0.0
        %v275 = vand.u32 %v228, 4294901760
        %276 = vmatpush1.msra.mxu0 %v275
        %277 = vmatprep.subr.mxu0 0.0
        %v278 = vand.u32 %v229, 4294901760
        %279 = vmatpush1.msra.mxu0 %v278
        %280 = vmatprep.subr.mxu0 0.0
        %281 = vmatpush1.msra.mxu0 0.0
        %282 = vmatprep.subr.mxu0 0.0
        %283 = vmatpush1.msra.mxu0 0.0
        %284 = vmatprep.subr.mxu0 0.0
        %285 = vmatpush1.msra.mxu0 0.0
        %286 = vmatprep.subr.mxu0 0.0
        %287 = vmatpush1.msra.mxu0 0.0
        %288 = vmatprep.subr.mxu0 0.0
        %289 = vmatpush1.msra.mxu0 0.0
        %290 = vmatprep.subr.mxu0 0.0
        %291 = vmatpush1.msra.mxu0 0.0
        %292 = vmatprep.subr.mxu0 0.0
        %293 = vmatpush1.msra.mxu0 0.0
        %294 = vmatprep.subr.mxu0 0.0
        %295 = vmatpush1.msra.mxu0 0.0
        %296 = vmatprep.subr.mxu0 0.0
        %297 = vmatpush1.msra.mxu0 0.0
        %298 = vmatprep.subr.mxu0 0.0
        %299 = vmatpush1.msra.mxu0 0.0
        %300 = vmatprep.subr.mxu0 0.0
        %301 = vmatpush1.msra.mxu0 0.0
        %302 = vmatprep.subr.mxu0 0.0
        %303 = vmatpush1.msra.mxu0 0.0
        %304 = vmatprep.subr.mxu0 0.0
        %305 = vmatpush1.msra.mxu0 0.0
        %306 = vmatprep.subr.mxu0 0.0
        %307 = vmatpush1.msra.mxu0 0.0
        %308 = vmatprep.subr.mxu0 0.0
        %309 = vmatpush1.msra.mxu0 0.0
        %310 = vmatprep.subr.mxu0 0.0
        %311 = vmatpush1.msra.mxu0 0.0
        %312 = vmatprep.mubr.f32.mxu0 0.0
        %v313 = vand.u32 %v206, 4294901760
        %v314 = vsub.f32 %v206, %v313
        %v315 = vand.u32 %v314, 4294901760
        %v316 = vsub.f32 %v314, %v315
        %v317 = vand.u32 %v316, 4294901760
        %318 = vmatmul.mubr.f32.gmra.mrb[0].mxu0 %v317
        %v319 = vpop.f32.mrb[0].mxu0
        %v320 = vadd.f32 0.0, %v319
        %v321 = vpop.f32.mrb[0].mxu0
        %322 = vmatprep.mubr.f32.mxu0 0.0
        %v323 = vand.u32 %v207, 4294901760
        %v324 = vsub.f32 %v207, %v323
        %v325 = vand.u32 %v324, 4294901760
        %v326 = vsub.f32 %v324, %v325
        %v327 = vand.u32 %v326, 4294901760
        %328 = vmatmul.mubr.f32.gmra.mrb[0].mxu0 %v327
        %v329 = vpop.f32.mrb[0].mxu0
        %v330 = vadd.f32 0.0, %v329
        %v331 = vpop.f32.mrb[0].mxu0
        %332 = vmatprep.mubr.f32.mxu0 0.0
        %v333 = vand.u32 %v208, 4294901760
        %v334 = vsub.f32 %v208, %v333
        %v335 = vand.u32 %v334, 4294901760
        %v336 = vsub.f32 %v334, %v335
        %v337 = vand.u32 %v336, 4294901760
        %338 = vmatmul.mubr.f32.gmra.mrb[0].mxu0 %v337
        %v339 = vpop.f32.mrb[0].mxu0
        %v340 = vadd.f32 0.0, %v339
        %v341 = vpop.f32.mrb[0].mxu0
        %342 = vmatprep.mubr.f32.mxu0 0.0
        %v343 = vand.u32 %v209, 4294901760
        %v344 = vsub.f32 %v209, %v343
        %v345 = vand.u32 %v344, 4294901760
        %v346 = vsub.f32 %v344, %v345
        %v347 = vand.u32 %v346, 4294901760
        %348 = vmatmul.mubr.f32.gmra.mrb[0].mxu0 %v347
        %v349 = vpop.f32.mrb[0].mxu0
        %v350 = vadd.f32 0.0, %v349
        %v351 = vpop.f32.mrb[0].mxu0
        %352 = vmatprep.mubr.f32.mxu0 0.0
        %v353 = vand.u32 %v210, 4294901760
        %v354 = vsub.f32 %v210, %v353
        %v355 = vand.u32 %v354, 4294901760
        %v356 = vsub.f32 %v354, %v355
        %v357 = vand.u32 %v356, 4294901760
        %358 = vmatmul.mubr.f32.gmra.mrb[0].mxu0 %v357
        %v359 = vpop.f32.mrb[0].mxu0
        %v360 = vadd.f32 0.0, %v359
        %v361 = vpop.f32.mrb[0].mxu0
        %362 = vmatprep.mubr.f32.mxu0 0.0
        %v363 = vand.u32 %v211, 4294901760
        %v364 = vsub.f32 %v211, %v363
        %v365 = vand.u32 %v364, 4294901760
        %v366 = vsub.f32 %v364, %v365
        %v367 = vand.u32 %v366, 4294901760
        %368 = vmatmul.mubr.f32.gmra.mrb[0].mxu0 %v367
        %v369 = vpop.f32.mrb[0].mxu0
        %v370 = vadd.f32 0.0, %v369
        %v371 = vpop.f32.mrb[0].mxu0
        %372 = vmatprep.mubr.f32.mxu0 0.0
        %v373 = vand.u32 %v212, 4294901760
        %v374 = vsub.f32 %v212, %v373
        %v375 = vand.u32 %v374, 4294901760
        %v376 = vsub.f32 %v374, %v375
        %v377 = vand.u32 %v376, 4294901760
        %378 = vmatmul.mubr.f32.gmra.mrb[0].mxu0 %v377
        %v379 = vpop.f32.mrb[0].mxu0
        %v380 = vadd.f32 0.0, %v379
        %v381 = vpop.f32.mrb[0].mxu0
        %382 = vmatprep.mubr.f32.mxu0 0.0
        %v383 = vand.u32 %v213, 4294901760
        %v384 = vsub.f32 %v213, %v383
        %v385 = vand.u32 %v384, 4294901760
        %v386 = vsub.f32 %v384, %v385
        %v387 = vand.u32 %v386, 4294901760
        %388 = vmatmul.mubr.f32.gmra.mrb[0].mxu0 %v387
        %v389 = vpop.f32.mrb[0].mxu0
        %v390 = vadd.f32 0.0, %v389
        %v391 = vpop.f32.mrb[0].mxu0
        %392 = vdwg.mxu0
        %393 = vmatprep.subr.mxu0 0.0
        %v394 = vand.u32 %v214, 4294901760
        %v395 = vsub.f32 %v214, %v394
        %v396 = vand.u32 %v395, 4294901760
        %v397 = vsub.f32 %v395, %v396
        %v398 = vand.u32 %v397, 4294901760
        %399 = vmatpush1.msra.mxu0 %v398
        %400 = vmatprep.subr.mxu0 0.0
        %v401 = vand.u32 %v215, 4294901760
        %v402 = vsub.f32 %v215, %v401
        %v403 = vand.u32 %v402, 4294901760
        %v404 = vsub.f32 %v402, %v403
        %v405 = vand.u32 %v404, 4294901760
        %406 = vmatpush1.msra.mxu0 %v405
        %407 = vmatprep.subr.mxu0 0.0
        %v408 = vand.u32 %v216, 4294901760
        %v409 = vsub.f32 %v216, %v408
        %v410 = vand.u32 %v409, 4294901760
        %v411 = vsub.f32 %v409, %v410
        %v412 = vand.u32 %v411, 4294901760
        %413 = vmatpush1.msra.mxu0 %v412
        %414 = vmatprep.subr.mxu0 0.0
        %v415 = vand.u32 %v217, 4294901760
        %v416 = vsub.f32 %v217, %v415
        %v417 = vand.u32 %v416, 4294901760
        %v418 = vsub.f32 %v416, %v417
        %v419 = vand.u32 %v418, 4294901760
        %420 = vmatpush1.msra.mxu0 %v419
        %421 = vmatprep.subr.mxu0 0.0
        %v422 = vand.u32 %v218, 4294901760
        %v423 = vsub.f32 %v218, %v422
        %v424 = vand.u32 %v423, 4294901760
        %v425 = vsub.f32 %v423, %v424
        %v426 = vand.u32 %v425, 4294901760
        %427 = vmatpush1.msra.mxu0 %v426
        %428 = vmatprep.subr.mxu0 0.0
        %v429 = vand.u32 %v219, 4294901760
        %v430 = vsub.f32 %v219, %v429
        %v431 = vand.u32 %v430, 4294901760
        %v432 = vsub.f32 %v430, %v431
        %v433 = vand.u32 %v432, 4294901760
        %434 = vmatpush1.msra.mxu0 %v433
        %435 = vmatprep.subr.mxu0 0.0
        %v436 = vand.u32 %v220, 4294901760
        %v437 = vsub.f32 %v220, %v436
        %v438 = vand.u32 %v437, 4294901760
        %v439 = vsub.f32 %v437, %v438
        %v440 = vand.u32 %v439, 4294901760
        %441 = vmatpush1.msra.mxu0 %v440
        %442 = vmatprep.subr.mxu0 0.0
        %v443 = vand.u32 %v221, 4294901760
        %v444 = vsub.f32 %v221, %v443
        %v445 = vand.u32 %v444, 4294901760
        %v446 = vsub.f32 %v444, %v445
        %v447 = vand.u32 %v446, 4294901760
        %448 = vmatpush1.msra.mxu0 %v447
        %449 = vmatprep.subr.mxu0 0.0
        %v450 = vand.u32 %v222, 4294901760
        %v451 = vsub.f32 %v222, %v450
        %v452 = vand.u32 %v451, 4294901760
        %v453 = vsub.f32 %v451, %v452
        %v454 = vand.u32 %v453, 4294901760
        %455 = vmatpush1.msra.mxu0 %v454
        %456 = vmatprep.subr.mxu0 0.0
        %v457 = vand.u32 %v223, 4294901760
        %v458 = vsub.f32 %v223, %v457
        %v459 = vand.u32 %v458, 4294901760
        %v460 = vsub.f32 %v458, %v459
        %v461 = vand.u32 %v460, 4294901760
        %462 = vmatpush1.msra.mxu0 %v461
        %463 = vmatprep.subr.mxu0 0.0
        %v464 = vand.u32 %v224, 4294901760
        %v465 = vsub.f32 %v224, %v464
        %v466 = vand.u32 %v465, 4294901760
        %v467 = vsub.f32 %v465, %v466
        %v468 = vand.u32 %v467, 4294901760
        %469 = vmatpush1.msra.mxu0 %v468
        %470 = vmatprep.subr.mxu0 0.0
        %v471 = vand.u32 %v225, 4294901760
        %v472 = vsub.f32 %v225, %v471
        %v473 = vand.u32 %v472, 4294901760
        %v474 = vsub.f32 %v472, %v473
        %v475 = vand.u32 %v474, 4294901760
        %476 = vmatpush1.msra.mxu0 %v475
        %477 = vmatprep.subr.mxu0 0.0
        %v478 = vand.u32 %v226, 4294901760
        %v479 = vsub.f32 %v226, %v478
        %v480 = vand.u32 %v479, 4294901760
        %v481 = vsub.f32 %v479, %v480
        %v482 = vand.u32 %v481, 4294901760
        %483 = vmatpush1.msra.mxu0 %v482
        %484 = vmatprep.subr.mxu0 0.0
        %v485 = vand.u32 %v227, 4294901760
        %v486 = vsub.f32 %v227, %v485
        %v487 = vand.u32 %v486, 4294901760
        %v488 = vsub.f32 %v486, %v487
        %v489 = vand.u32 %v488, 4294901760
        %490 = vmatpush1.msra.mxu0 %v489
        %491 = vmatprep.subr.mxu0 0.0
        %v492 = vand.u32 %v228, 4294901760
        %v493 = vsub.f32 %v228, %v492
        %v494 = vand.u32 %v493, 4294901760
        %v495 = vsub.f32 %v493, %v494
        %v496 = vand.u32 %v495, 4294901760
        %497 = vmatpush1.msra.mxu0 %v496
        %498 = vmatprep.subr.mxu0 0.0
        %v499 = vand.u32 %v229, 4294901760
        %v500 = vsub.f32 %v229, %v499
        %v501 = vand.u32 %v500, 4294901760
        %v502 = vsub.f32 %v500, %v501
        %v503 = vand.u32 %v502, 4294901760
        %504 = vmatpush1.msra.mxu0 %v503
        %505 = vmatprep.subr.mxu0 0.0
        %506 = vmatpush1.msra.mxu0 0.0
        %507 = vmatprep.subr.mxu0 0.0
        %508 = vmatpush1.msra.mxu0 0.0
        %509 = vmatprep.subr.mxu0 0.0
        %510 = vmatpush1.msra.mxu0 0.0
        %511 = vmatprep.subr.mxu0 0.0
        %512 = vmatpush1.msra.mxu0 0.0
        %513 = vmatprep.subr.mxu0 0.0
        %514 = vmatpush1.msra.mxu0 0.0
        %515 = vmatprep.subr.mxu0 0.0
        %516 = vmatpush1.msra.mxu0 0.0
        %517 = vmatprep.subr.mxu0 0.0
        %518 = vmatpush1.msra.mxu0 0.0
        %519 = vmatprep.subr.mxu0 0.0
        %520 = vmatpush1.msra.mxu0 0.0
        %521 = vmatprep.subr.mxu0 0.0
        %522 = vmatpush1.msra.mxu0 0.0
        %523 = vmatprep.subr.mxu0 0.0
        %524 = vmatpush1.msra.mxu0 0.0
        %525 = vmatprep.subr.mxu0 0.0
        %526 = vmatpush1.msra.mxu0 0.0
        %527 = vmatprep.subr.mxu0 0.0
        %528 = vmatpush1.msra.mxu0 0.0
        %529 = vmatprep.subr.mxu0 0.0
        %530 = vmatpush1.msra.mxu0 0.0
        %531 = vmatprep.subr.mxu0 0.0
        %532 = vmatpush1.msra.mxu0 0.0
        %533 = vmatprep.subr.mxu0 0.0
        %534 = vmatpush1.msra.mxu0 0.0
        %535 = vmatprep.subr.mxu0 0.0
        %536 = vmatpush1.msra.mxu0 0.0
        %537 = vmatprep.mubr.f32.mxu0 0.0
        %v538 = vand.u32 %v206, 4294901760
        %539 = vmatmul.mubr.f32.gmra.mrb[0].mxu0 %v538
        %v540 = vpop.f32.mrb[0].mxu0
        %v541 = vadd.f32 %v320, %v540
        %v542 = vpop.f32.mrb[0].mxu0
        %543 = vmatprep.mubr.f32.mxu0 0.0
        %v544 = vand.u32 %v207, 4294901760
        %545 = vmatmul.mubr.f32.gmra.mrb[0].mxu0 %v544
        %v546 = vpop.f32.mrb[0].mxu0
        %v547 = vadd.f32 %v330, %v546
        %v548 = vpop.f32.mrb[0].mxu0
        %549 = vmatprep.mubr.f32.mxu0 0.0
        %v550 = vand.u32 %v208, 4294901760
        %551 = vmatmul.mubr.f32.gmra.mrb[0].mxu0 %v550
        %v552 = vpop.f32.mrb[0].mxu0
        %v553 = vadd.f32 %v340, %v552
        %v554 = vpop.f32.mrb[0].mxu0
        %555 = vmatprep.mubr.f32.mxu0 0.0
        %v556 = vand.u32 %v209, 4294901760
        %557 = vmatmul.mubr.f32.gmra.mrb[0].mxu0 %v556
        %v558 = vpop.f32.mrb[0].mxu0
        %v559 = vadd.f32 %v350, %v558
        %v560 = vpop.f32.mrb[0].mxu0
        %561 = vmatprep.mubr.f32.mxu0 0.0
        %v562 = vand.u32 %v210, 4294901760
        %563 = vmatmul.mubr.f32.gmra.mrb[0].mxu0 %v562
        %v564 = vpop.f32.mrb[0].mxu0
        %v565 = vadd.f32 %v360, %v564
        %v566 = vpop.f32.mrb[0].mxu0
        %567 = vmatprep.mubr.f32.mxu0 0.0
        %v568 = vand.u32 %v211, 4294901760
        %569 = vmatmul.mubr.f32.gmra.mrb[0].mxu0 %v568
        %v570 = vpop.f32.mrb[0].mxu0
        %v571 = vadd.f32 %v370, %v570
        %v572 = vpop.f32.mrb[0].mxu0
        %573 = vmatprep.mubr.f32.mxu0 0.0
        %v574 = vand.u32 %v212, 4294901760
        %575 = vmatmul.mubr.f32.gmra.mrb[0].mxu0 %v574
        %v576 = vpop.f32.mrb[0].mxu0
        %v577 = vadd.f32 %v380, %v576
        %v578 = vpop.f32.mrb[0].mxu0
        %579 = vmatprep.mubr.f32.mxu0 0.0
        %v580 = vand.u32 %v213, 4294901760
        %581 = vmatmul.mubr.f32.gmra.mrb[0].mxu0 %v580
        %v582 = vpop.f32.mrb[0].mxu0
        %v583 = vadd.f32 %v390, %v582
        %v584 = vpop.f32.mrb[0].mxu0
        %585 = vdwg.mxu0
        %586 = vmatprep.subr.mxu0 0.0
        %v587 = vand.u32 %v214, 4294901760
        %v588 = vsub.f32 %v214, %v587
        %589 = vmatpush1.msra.mxu0 %v588
        %590 = vmatprep.subr.mxu0 0.0
        %v591 = vand.u32 %v215, 4294901760
        %v592 = vsub.f32 %v215, %v591
        %593 = vmatpush1.msra.mxu0 %v592
        %594 = vmatprep.subr.mxu0 0.0
        %v595 = vand.u32 %v216, 4294901760
        %v596 = vsub.f32 %v216, %v595
        %597 = vmatpush1.msra.mxu0 %v596
        %598 = vmatprep.subr.mxu0 0.0
        %v599 = vand.u32 %v217, 4294901760
        %v600 = vsub.f32 %v217, %v599
        %601 = vmatpush1.msra.mxu0 %v600
        %602 = vmatprep.subr.mxu0 0.0
        %v603 = vand.u32 %v218, 4294901760
        %v604 = vsub.f32 %v218, %v603
        %605 = vmatpush1.msra.mxu0 %v604
        %606 = vmatprep.subr.mxu0 0.0
        %v607 = vand.u32 %v219, 4294901760
        %v608 = vsub.f32 %v219, %v607
        %609 = vmatpush1.msra.mxu0 %v608
        %610 = vmatprep.subr.mxu0 0.0
        %v611 = vand.u32 %v220, 4294901760
        %v612 = vsub.f32 %v220, %v611
        %613 = vmatpush1.msra.mxu0 %v612
        %614 = vmatprep.subr.mxu0 0.0
        %v615 = vand.u32 %v221, 4294901760
        %v616 = vsub.f32 %v221, %v615
        %617 = vmatpush1.msra.mxu0 %v616
        %618 = vmatprep.subr.mxu0 0.0
        %v619 = vand.u32 %v222, 4294901760
        %v620 = vsub.f32 %v222, %v619
        %621 = vmatpush1.msra.mxu0 %v620
        %622 = vmatprep.subr.mxu0 0.0
        %v623 = vand.u32 %v223, 4294901760
        %v624 = vsub.f32 %v223, %v623
        %625 = vmatpush1.msra.mxu0 %v624
        %626 = vmatprep.subr.mxu0 0.0
        %v627 = vand.u32 %v224, 4294901760
        %v628 = vsub.f32 %v224, %v627
        %629 = vmatpush1.msra.mxu0 %v628
        %630 = vmatprep.subr.mxu0 0.0
        %v631 = vand.u32 %v225, 4294901760
        %v632 = vsub.f32 %v225, %v631
        %633 = vmatpush1.msra.mxu0 %v632
        %634 = vmatprep.subr.mxu0 0.0
        %v635 = vand.u32 %v226, 4294901760
        %v636 = vsub.f32 %v226, %v635
        %637 = vmatpush1.msra.mxu0 %v636
        %638 = vmatprep.subr.mxu0 0.0
        %v639 = vand.u32 %v227, 4294901760
        %v640 = vsub.f32 %v227, %v639
        %641 = vmatpush1.msra.mxu0 %v640
        %642 = vmatprep.subr.mxu0 0.0
        %v643 = vand.u32 %v228, 4294901760
        %v644 = vsub.f32 %v228, %v643
        %645 = vmatpush1.msra.mxu0 %v644
        %646 = vmatprep.subr.mxu0 0.0
        %v647 = vand.u32 %v229, 4294901760
        %v648 = vsub.f32 %v229, %v647
        %649 = vmatpush1.msra.mxu0 %v648
        %650 = vmatprep.subr.mxu0 0.0
        %651 = vmatpush1.msra.mxu0 0.0
        %652 = vmatprep.subr.mxu0 0.0
        %653 = vmatpush1.msra.mxu0 0.0
        %654 = vmatprep.subr.mxu0 0.0
        %655 = vmatpush1.msra.mxu0 0.0
        %656 = vmatprep.subr.mxu0 0.0
        %657 = vmatpush1.msra.mxu0 0.0
        %658 = vmatprep.subr.mxu0 0.0
        %659 = vmatpush1.msra.mxu0 0.0
        %660 = vmatprep.subr.mxu0 0.0
        %661 = vmatpush1.msra.mxu0 0.0
        %662 = vmatprep.subr.mxu0 0.0
        %663 = vmatpush1.msra.mxu0 0.0
        %664 = vmatprep.subr.mxu0 0.0
        %665 = vmatpush1.msra.mxu0 0.0
        %666 = vmatprep.subr.mxu0 0.0
        %667 = vmatpush1.msra.mxu0 0.0
        %668 = vmatprep.subr.mxu0 0.0
        %669 = vmatpush1.msra.mxu0 0.0
        %670 = vmatprep.subr.mxu0 0.0
        %671 = vmatpush1.msra.mxu0 0.0
        %672 = vmatprep.subr.mxu0 0.0
        %673 = vmatpush1.msra.mxu0 0.0
        %674 = vmatprep.subr.mxu0 0.0
        %675 = vmatpush1.msra.mxu0 0.0
        %676 = vmatprep.subr.mxu0 0.0
        %677 = vmatpush1.msra.mxu0 0.0
        %678 = vmatprep.subr.mxu0 0.0
        %679 = vmatpush1.msra.mxu0 0.0
        %680 = vmatprep.subr.mxu0 0.0
        %681 = vmatpush1.msra.mxu0 0.0
        %682 = vmatprep.mubr.f32.mxu0 0.0
        %v683 = vand.u32 %v206, 4294901760
        %v684 = vsub.f32 %v206, %v683
        %685 = vmatmul.mubr.f32.gmra.mrb[0].mxu0 %v684
        %v686 = vpop.f32.mrb[0].mxu0
        %v687 = vadd.f32 %v541, %v686
        %v688 = vpop.f32.mrb[0].mxu0
        %689 = vmatprep.mubr.f32.mxu0 0.0
        %v690 = vand.u32 %v207, 4294901760
        %v691 = vsub.f32 %v207, %v690
        %692 = vmatmul.mubr.f32.gmra.mrb[0].mxu0 %v691
        %v693 = vpop.f32.mrb[0].mxu0
        %v694 = vadd.f32 %v547, %v693
        %v695 = vpop.f32.mrb[0].mxu0
        %696 = vmatprep.mubr.f32.mxu0 0.0
        %v697 = vand.u32 %v208, 4294901760
        %v698 = vsub.f32 %v208, %v697
        %699 = vmatmul.mubr.f32.gmra.mrb[0].mxu0 %v698
        %v700 = vpop.f32.mrb[0].mxu0
        %v701 = vadd.f32 %v553, %v700
        %v702 = vpop.f32.mrb[0].mxu0
        %703 = vmatprep.mubr.f32.mxu0 0.0
        %v704 = vand.u32 %v209, 4294901760
        %v705 = vsub.f32 %v209, %v704
        %706 = vmatmul.mubr.f32.gmra.mrb[0].mxu0 %v705
        %v707 = vpop.f32.mrb[0].mxu0
        %v708 = vadd.f32 %v559, %v707
        %v709 = vpop.f32.mrb[0].mxu0
        %710 = vmatprep.mubr.f32.mxu0 0.0
        %v711 = vand.u32 %v210, 4294901760
        %v712 = vsub.f32 %v210, %v711
        %713 = vmatmul.mubr.f32.gmra.mrb[0].mxu0 %v712
        %v714 = vpop.f32.mrb[0].mxu0
        %v715 = vadd.f32 %v565, %v714
        %v716 = vpop.f32.mrb[0].mxu0
        %717 = vmatprep.mubr.f32.mxu0 0.0
        %v718 = vand.u32 %v211, 4294901760
        %v719 = vsub.f32 %v211, %v718
        %720 = vmatmul.mubr.f32.gmra.mrb[0].mxu0 %v719
        %v721 = vpop.f32.mrb[0].mxu0
        %v722 = vadd.f32 %v571, %v721
        %v723 = vpop.f32.mrb[0].mxu0
        %724 = vmatprep.mubr.f32.mxu0 0.0
        %v725 = vand.u32 %v212, 4294901760
        %v726 = vsub.f32 %v212, %v725
        %727 = vmatmul.mubr.f32.gmra.mrb[0].mxu0 %v726
        %v728 = vpop.f32.mrb[0].mxu0
        %v729 = vadd.f32 %v577, %v728
        %v730 = vpop.f32.mrb[0].mxu0
        %731 = vmatprep.mubr.f32.mxu0 0.0
        %v732 = vand.u32 %v213, 4294901760
        %v733 = vsub.f32 %v213, %v732
        %734 = vmatmul.mubr.f32.gmra.mrb[0].mxu0 %v733
        %v735 = vpop.f32.mrb[0].mxu0
        %v736 = vadd.f32 %v583, %v735
        %v737 = vpop.f32.mrb[0].mxu0
        %738 = vdwg.mxu0
        %739 = vmatprep.subr.mxu0 0.0
        %v740 = vand.u32 %v214, 4294901760
        %741 = vmatpush1.msra.mxu0 %v740
        %742 = vmatprep.subr.mxu0 0.0
        %v743 = vand.u32 %v215, 4294901760
        %744 = vmatpush1.msra.mxu0 %v743
        %745 = vmatprep.subr.mxu0 0.0
        %v746 = vand.u32 %v216, 4294901760
        %747 = vmatpush1.msra.mxu0 %v746
        %748 = vmatprep.subr.mxu0 0.0
        %v749 = vand.u32 %v217, 4294901760
        %750 = vmatpush1.msra.mxu0 %v749
        %751 = vmatprep.subr.mxu0 0.0
        %v752 = vand.u32 %v218, 4294901760
        %753 = vmatpush1.msra.mxu0 %v752
        %754 = vmatprep.subr.mxu0 0.0
        %v755 = vand.u32 %v219, 4294901760
        %756 = vmatpush1.msra.mxu0 %v755
        %757 = vmatprep.subr.mxu0 0.0
        %v758 = vand.u32 %v220, 4294901760
        %759 = vmatpush1.msra.mxu0 %v758
        %760 = vmatprep.subr.mxu0 0.0
        %v761 = vand.u32 %v221, 4294901760
        %762 = vmatpush1.msra.mxu0 %v761
        %763 = vmatprep.subr.mxu0 0.0
        %v764 = vand.u32 %v222, 4294901760
        %765 = vmatpush1.msra.mxu0 %v764
        %766 = vmatprep.subr.mxu0 0.0
        %v767 = vand.u32 %v223, 4294901760
        %768 = vmatpush1.msra.mxu0 %v767
        %769 = vmatprep.subr.mxu0 0.0
        %v770 = vand.u32 %v224, 4294901760
        %771 = vmatpush1.msra.mxu0 %v770
        %772 = vmatprep.subr.mxu0 0.0
        %v773 = vand.u32 %v225, 4294901760
        %774 = vmatpush1.msra.mxu0 %v773
        %775 = vmatprep.subr.mxu0 0.0
        %v776 = vand.u32 %v226, 4294901760
        %777 = vmatpush1.msra.mxu0 %v776
        %778 = vmatprep.subr.mxu0 0.0
        %v779 = vand.u32 %v227, 4294901760
        %780 = vmatpush1.msra.mxu0 %v779
        %781 = vmatprep.subr.mxu0 0.0
        %v782 = vand.u32 %v228, 4294901760
        %783 = vmatpush1.msra.mxu0 %v782
        %784 = vmatprep.subr.mxu0 0.0
        %v785 = vand.u32 %v229, 4294901760
        %786 = vmatpush1.msra.mxu0 %v785
        %787 = vmatprep.subr.mxu0 0.0
        %788 = vmatpush1.msra.mxu0 0.0
        %789 = vmatprep.subr.mxu0 0.0
        %790 = vmatpush1.msra.mxu0 0.0
        %791 = vmatprep.subr.mxu0 0.0
        %792 = vmatpush1.msra.mxu0 0.0
        %793 = vmatprep.subr.mxu0 0.0
        %794 = vmatpush1.msra.mxu0 0.0
        %795 = vmatprep.subr.mxu0 0.0
        %796 = vmatpush1.msra.mxu0 0.0
        %797 = vmatprep.subr.mxu0 0.0
        %798 = vmatpush1.msra.mxu0 0.0
        %799 = vmatprep.subr.mxu0 0.0
        %800 = vmatpush1.msra.mxu0 0.0
        %801 = vmatprep.subr.mxu0 0.0
        %802 = vmatpush1.msra.mxu0 0.0
        %803 = vmatprep.subr.mxu0 0.0
        %804 = vmatpush1.msra.mxu0 0.0
        %805 = vmatprep.subr.mxu0 0.0
        %806 = vmatpush1.msra.mxu0 0.0
        %807 = vmatprep.subr.mxu0 0.0
        %808 = vmatpush1.msra.mxu0 0.0
        %809 = vmatprep.subr.mxu0 0.0
        %810 = vmatpush1.msra.mxu0 0.0
        %811 = vmatprep.subr.mxu0 0.0
        %812 = vmatpush1.msra.mxu0 0.0
        %813 = vmatprep.subr.mxu0 0.0
        %814 = vmatpush1.msra.mxu0 0.0
        %815 = vmatprep.subr.mxu0 0.0
        %816 = vmatpush1.msra.mxu0 0.0
        %817 = vmatprep.subr.mxu0 0.0
        %818 = vmatpush1.msra.mxu0 0.0
        %819 = vmatprep.mubr.f32.mxu0 0.0
        %v820 = vand.u32 %v206, 4294901760
        %v821 = vsub.f32 %v206, %v820
        %v822 = vand.u32 %v821, 4294901760
        %823 = vmatmul.mubr.f32.gmra.mrb[0].mxu0 %v822
        %v824 = vpop.f32.mrb[0].mxu0
        %v825 = vadd.f32 %v687, %v824
        %v826 = vpop.f32.mrb[0].mxu0
        %827 = vmatprep.mubr.f32.mxu0 0.0
        %v828 = vand.u32 %v207, 4294901760
        %v829 = vsub.f32 %v207, %v828
        %v830 = vand.u32 %v829, 4294901760
        %831 = vmatmul.mubr.f32.gmra.mrb[0].mxu0 %v830
        %v832 = vpop.f32.mrb[0].mxu0
        %v833 = vadd.f32 %v694, %v832
        %v834 = vpop.f32.mrb[0].mxu0
        %835 = vmatprep.mubr.f32.mxu0 0.0
        %v836 = vand.u32 %v208, 4294901760
        %v837 = vsub.f32 %v208, %v836
        %v838 = vand.u32 %v837, 4294901760
        %839 = vmatmul.mubr.f32.gmra.mrb[0].mxu0 %v838
        %v840 = vpop.f32.mrb[0].mxu0
        %v841 = vadd.f32 %v701, %v840
        %v842 = vpop.f32.mrb[0].mxu0
        %843 = vmatprep.mubr.f32.mxu0 0.0
        %v844 = vand.u32 %v209, 4294901760
        %v845 = vsub.f32 %v209, %v844
        %v846 = vand.u32 %v845, 4294901760
        %847 = vmatmul.mubr.f32.gmra.mrb[0].mxu0 %v846
        %v848 = vpop.f32.mrb[0].mxu0
        %v849 = vadd.f32 %v708, %v848
        %v850 = vpop.f32.mrb[0].mxu0
        %851 = vmatprep.mubr.f32.mxu0 0.0
        %v852 = vand.u32 %v210, 4294901760
        %v853 = vsub.f32 %v210, %v852
        %v854 = vand.u32 %v853, 4294901760
        %855 = vmatmul.mubr.f32.gmra.mrb[0].mxu0 %v854
        %v856 = vpop.f32.mrb[0].mxu0
        %v857 = vadd.f32 %v715, %v856
        %v858 = vpop.f32.mrb[0].mxu0
        %859 = vmatprep.mubr.f32.mxu0 0.0
        %v860 = vand.u32 %v211, 4294901760
        %v861 = vsub.f32 %v211, %v860
        %v862 = vand.u32 %v861, 4294901760
        %863 = vmatmul.mubr.f32.gmra.mrb[0].mxu0 %v862
        %v864 = vpop.f32.mrb[0].mxu0
        %v865 = vadd.f32 %v722, %v864
        %v866 = vpop.f32.mrb[0].mxu0
        %867 = vmatprep.mubr.f32.mxu0 0.0
        %v868 = vand.u32 %v212, 4294901760
        %v869 = vsub.f32 %v212, %v868
        %v870 = vand.u32 %v869, 4294901760
        %871 = vmatmul.mubr.f32.gmra.mrb[0].mxu0 %v870
        %v872 = vpop.f32.mrb[0].mxu0
        %v873 = vadd.f32 %v729, %v872
        %v874 = vpop.f32.mrb[0].mxu0
        %875 = vmatprep.mubr.f32.mxu0 0.0
        %v876 = vand.u32 %v213, 4294901760
        %v877 = vsub.f32 %v213, %v876
        %v878 = vand.u32 %v877, 4294901760
        %879 = vmatmul.mubr.f32.gmra.mrb[0].mxu0 %v878
        %v880 = vpop.f32.mrb[0].mxu0
        %v881 = vadd.f32 %v736, %v880
        %v882 = vpop.f32.mrb[0].mxu0
        %883 = vdwg.mxu0
        %884 = vmatprep.subr.mxu0 0.0
        %v885 = vand.u32 %v214, 4294901760
        %v886 = vsub.f32 %v214, %v885
        %v887 = vand.u32 %v886, 4294901760
        %888 = vmatpush1.msra.mxu0 %v887
        %889 = vmatprep.subr.mxu0 0.0
        %v890 = vand.u32 %v215, 4294901760
        %v891 = vsub.f32 %v215, %v890
        %v892 = vand.u32 %v891, 4294901760
        %893 = vmatpush1.msra.mxu0 %v892
        %894 = vmatprep.subr.mxu0 0.0
        %v895 = vand.u32 %v216, 4294901760
        %v896 = vsub.f32 %v216, %v895
        %v897 = vand.u32 %v896, 4294901760
        %898 = vmatpush1.msra.mxu0 %v897
        %899 = vmatprep.subr.mxu0 0.0
        %v900 = vand.u32 %v217, 4294901760
        %v901 = vsub.f32 %v217, %v900
        %v902 = vand.u32 %v901, 4294901760
        %903 = vmatpush1.msra.mxu0 %v902
        %904 = vmatprep.subr.mxu0 0.0
        %v905 = vand.u32 %v218, 4294901760
        %v906 = vsub.f32 %v218, %v905
        %v907 = vand.u32 %v906, 4294901760
        %908 = vmatpush1.msra.mxu0 %v907
        %909 = vmatprep.subr.mxu0 0.0
        %v910 = vand.u32 %v219, 4294901760
        %v911 = vsub.f32 %v219, %v910
        %v912 = vand.u32 %v911, 4294901760
        %913 = vmatpush1.msra.mxu0 %v912
        %914 = vmatprep.subr.mxu0 0.0
        %v915 = vand.u32 %v220, 4294901760
        %v916 = vsub.f32 %v220, %v915
        %v917 = vand.u32 %v916, 4294901760
        %918 = vmatpush1.msra.mxu0 %v917
        %919 = vmatprep.subr.mxu0 0.0
        %v920 = vand.u32 %v221, 4294901760
        %v921 = vsub.f32 %v221, %v920
        %v922 = vand.u32 %v921, 4294901760
        %923 = vmatpush1.msra.mxu0 %v922
        %924 = vmatprep.subr.mxu0 0.0
        %v925 = vand.u32 %v222, 4294901760
        %v926 = vsub.f32 %v222, %v925
        %v927 = vand.u32 %v926, 4294901760
        %928 = vmatpush1.msra.mxu0 %v927
        %929 = vmatprep.subr.mxu0 0.0
        %v930 = vand.u32 %v223, 4294901760
        %v931 = vsub.f32 %v223, %v930
        %v932 = vand.u32 %v931, 4294901760
        %933 = vmatpush1.msra.mxu0 %v932
        %934 = vmatprep.subr.mxu0 0.0
        %v935 = vand.u32 %v224, 4294901760
        %v936 = vsub.f32 %v224, %v935
        %v937 = vand.u32 %v936, 4294901760
        %938 = vmatpush1.msra.mxu0 %v937
        %939 = vmatprep.subr.mxu0 0.0
        %v940 = vand.u32 %v225, 4294901760
        %v941 = vsub.f32 %v225, %v940
        %v942 = vand.u32 %v941, 4294901760
        %943 = vmatpush1.msra.mxu0 %v942
        %944 = vmatprep.subr.mxu0 0.0
        %v945 = vand.u32 %v226, 4294901760
        %v946 = vsub.f32 %v226, %v945
        %v947 = vand.u32 %v946, 4294901760
        %948 = vmatpush1.msra.mxu0 %v947
        %949 = vmatprep.subr.mxu0 0.0
        %v950 = vand.u32 %v227, 4294901760
        %v951 = vsub.f32 %v227, %v950
        %v952 = vand.u32 %v951, 4294901760
        %953 = vmatpush1.msra.mxu0 %v952
        %954 = vmatprep.subr.mxu0 0.0
        %v955 = vand.u32 %v228, 4294901760
        %v956 = vsub.f32 %v228, %v955
        %v957 = vand.u32 %v956, 4294901760
        %958 = vmatpush1.msra.mxu0 %v957
        %959 = vmatprep.subr.mxu0 0.0
        %v960 = vand.u32 %v229, 4294901760
        %v961 = vsub.f32 %v229, %v960
        %v962 = vand.u32 %v961, 4294901760
        %963 = vmatpush1.msra.mxu0 %v962
        %964 = vmatprep.subr.mxu0 0.0
        %965 = vmatpush1.msra.mxu0 0.0
        %966 = vmatprep.subr.mxu0 0.0
        %967 = vmatpush1.msra.mxu0 0.0
        %968 = vmatprep.subr.mxu0 0.0
        %969 = vmatpush1.msra.mxu0 0.0
        %970 = vmatprep.subr.mxu0 0.0
        %971 = vmatpush1.msra.mxu0 0.0
        %972 = vmatprep.subr.mxu0 0.0
        %973 = vmatpush1.msra.mxu0 0.0
        %974 = vmatprep.subr.mxu0 0.0
        %975 = vmatpush1.msra.mxu0 0.0
        %976 = vmatprep.subr.mxu0 0.0
        %977 = vmatpush1.msra.mxu0 0.0
        %978 = vmatprep.subr.mxu0 0.0
        %979 = vmatpush1.msra.mxu0 0.0
        %980 = vmatprep.subr.mxu0 0.0
        %981 = vmatpush1.msra.mxu0 0.0
        %982 = vmatprep.subr.mxu0 0.0
        %983 = vmatpush1.msra.mxu0 0.0
        %984 = vmatprep.subr.mxu0 0.0
        %985 = vmatpush1.msra.mxu0 0.0
        %986 = vmatprep.subr.mxu0 0.0
        %987 = vmatpush1.msra.mxu0 0.0
        %988 = vmatprep.subr.mxu0 0.0
        %989 = vmatpush1.msra.mxu0 0.0
        %990 = vmatprep.subr.mxu0 0.0
        %991 = vmatpush1.msra.mxu0 0.0
        %992 = vmatprep.subr.mxu0 0.0
        %993 = vmatpush1.msra.mxu0 0.0
        %994 = vmatprep.subr.mxu0 0.0
        %995 = vmatpush1.msra.mxu0 0.0
        %996 = vmatprep.mubr.f32.mxu0 0.0
        %v997 = vand.u32 %v206, 4294901760
        %998 = vmatmul.mubr.f32.gmra.mrb[0].mxu0 %v997
        %v999 = vpop.f32.mrb[0].mxu0
        %v1000 = vadd.f32 %v825, %v999
        %v1001 = vpop.f32.mrb[0].mxu0
        %1002 = vmatprep.mubr.f32.mxu0 0.0
        %v1003 = vand.u32 %v207, 4294901760
        %1004 = vmatmul.mubr.f32.gmra.mrb[0].mxu0 %v1003
        %v1005 = vpop.f32.mrb[0].mxu0
        %v1006 = vadd.f32 %v833, %v1005
        %v1007 = vpop.f32.mrb[0].mxu0
        %1008 = vmatprep.mubr.f32.mxu0 0.0
        %v1009 = vand.u32 %v208, 4294901760
        %1010 = vmatmul.mubr.f32.gmra.mrb[0].mxu0 %v1009
        %v1011 = vpop.f32.mrb[0].mxu0
        %v1012 = vadd.f32 %v841, %v1011
        %v1013 = vpop.f32.mrb[0].mxu0
        %1014 = vmatprep.mubr.f32.mxu0 0.0
        %v1015 = vand.u32 %v209, 4294901760
        %1016 = vmatmul.mubr.f32.gmra.mrb[0].mxu0 %v1015
        %v1017 = vpop.f32.mrb[0].mxu0
        %v1018 = vadd.f32 %v849, %v1017
        %v1019 = vpop.f32.mrb[0].mxu0
        %1020 = vmatprep.mubr.f32.mxu0 0.0
        %v1021 = vand.u32 %v210, 4294901760
        %1022 = vmatmul.mubr.f32.gmra.mrb[0].mxu0 %v1021
        %v1023 = vpop.f32.mrb[0].mxu0
        %v1024 = vadd.f32 %v857, %v1023
        %v1025 = vpop.f32.mrb[0].mxu0
        %1026 = vmatprep.mubr.f32.mxu0 0.0
        %v1027 = vand.u32 %v211, 4294901760
        %1028 = vmatmul.mubr.f32.gmra.mrb[0].mxu0 %v1027
        %v1029 = vpop.f32.mrb[0].mxu0
        %v1030 = vadd.f32 %v865, %v1029
        %v1031 = vpop.f32.mrb[0].mxu0
        %1032 = vmatprep.mubr.f32.mxu0 0.0
        %v1033 = vand.u32 %v212, 4294901760
        %1034 = vmatmul.mubr.f32.gmra.mrb[0].mxu0 %v1033
        %v1035 = vpop.f32.mrb[0].mxu0
        %v1036 = vadd.f32 %v873, %v1035
        %v1037 = vpop.f32.mrb[0].mxu0
        %1038 = vmatprep.mubr.f32.mxu0 0.0
        %v1039 = vand.u32 %v213, 4294901760
        %1040 = vmatmul.mubr.f32.gmra.mrb[0].mxu0 %v1039
        %v1041 = vpop.f32.mrb[0].mxu0
        %v1042 = vadd.f32 %v881, %v1041
        %v1043 = vpop.f32.mrb[0].mxu0
        %1044 = vdwg.mxu0
        %1045 = vmatprep.subr.mxu0 0.0
        %v1046 = vand.u32 %v214, 4294901760
        %1047 = vmatpush1.msra.mxu0 %v1046
        %1048 = vmatprep.subr.mxu0 0.0
        %v1049 = vand.u32 %v215, 4294901760
        %1050 = vmatpush1.msra.mxu0 %v1049
        %1051 = vmatprep.subr.mxu0 0.0
        %v1052 = vand.u32 %v216, 4294901760
        %1053 = vmatpush1.msra.mxu0 %v1052
        %1054 = vmatprep.subr.mxu0 0.0
        %v1055 = vand.u32 %v217, 4294901760
        %1056 = vmatpush1.msra.mxu0 %v1055
        %1057 = vmatprep.subr.mxu0 0.0
        %v1058 = vand.u32 %v218, 4294901760
        %1059 = vmatpush1.msra.mxu0 %v1058
        %1060 = vmatprep.subr.mxu0 0.0
        %v1061 = vand.u32 %v219, 4294901760
        %1062 = vmatpush1.msra.mxu0 %v1061
        %1063 = vmatprep.subr.mxu0 0.0
        %v1064 = vand.u32 %v220, 4294901760
        %1065 = vmatpush1.msra.mxu0 %v1064
        %1066 = vmatprep.subr.mxu0 0.0
        %v1067 = vand.u32 %v221, 4294901760
        %1068 = vmatpush1.msra.mxu0 %v1067
        %1069 = vmatprep.subr.mxu0 0.0
        %v1070 = vand.u32 %v222, 4294901760
        %1071 = vmatpush1.msra.mxu0 %v1070
        %1072 = vmatprep.subr.mxu0 0.0
        %v1073 = vand.u32 %v223, 4294901760
        %1074 = vmatpush1.msra.mxu0 %v1073
        %1075 = vmatprep.subr.mxu0 0.0
        %v1076 = vand.u32 %v224, 4294901760
        %1077 = vmatpush1.msra.mxu0 %v1076
        %1078 = vmatprep.subr.mxu0 0.0
        %v1079 = vand.u32 %v225, 4294901760
        %1080 = vmatpush1.msra.mxu0 %v1079
        %1081 = vmatprep.subr.mxu0 0.0
        %v1082 = vand.u32 %v226, 4294901760
        %1083 = vmatpush1.msra.mxu0 %v1082
        %1084 = vmatprep.subr.mxu0 0.0
        %v1085 = vand.u32 %v227, 4294901760
        %1086 = vmatpush1.msra.mxu0 %v1085
        %1087 = vmatprep.subr.mxu0 0.0
        %v1088 = vand.u32 %v228, 4294901760
        %1089 = vmatpush1.msra.mxu0 %v1088
        %1090 = vmatprep.subr.mxu0 0.0
        %v1091 = vand.u32 %v229, 4294901760
        %1092 = vmatpush1.msra.mxu0 %v1091
        %1093 = vmatprep.subr.mxu0 0.0
        %1094 = vmatpush1.msra.mxu0 0.0
        %1095 = vmatprep.subr.mxu0 0.0
        %1096 = vmatpush1.msra.mxu0 0.0
        %1097 = vmatprep.subr.mxu0 0.0
        %1098 = vmatpush1.msra.mxu0 0.0
        %1099 = vmatprep.subr.mxu0 0.0
        %1100 = vmatpush1.msra.mxu0 0.0
        %1101 = vmatprep.subr.mxu0 0.0
        %1102 = vmatpush1.msra.mxu0 0.0
        %1103 = vmatprep.subr.mxu0 0.0
        %1104 = vmatpush1.msra.mxu0 0.0
        %1105 = vmatprep.subr.mxu0 0.0
        %1106 = vmatpush1.msra.mxu0 0.0
        %1107 = vmatprep.subr.mxu0 0.0
        %1108 = vmatpush1.msra.mxu0 0.0
        %1109 = vmatprep.subr.mxu0 0.0
        %1110 = vmatpush1.msra.mxu0 0.0
        %1111 = vmatprep.subr.mxu0 0.0
        %1112 = vmatpush1.msra.mxu0 0.0
        %1113 = vmatprep.subr.mxu0 0.0
        %1114 = vmatpush1.msra.mxu0 0.0
        %1115 = vmatprep.subr.mxu0 0.0
        %1116 = vmatpush1.msra.mxu0 0.0
        %1117 = vmatprep.subr.mxu0 0.0
        %1118 = vmatpush1.msra.mxu0 0.0
        %1119 = vmatprep.subr.mxu0 0.0
        %1120 = vmatpush1.msra.mxu0 0.0
        %1121 = vmatprep.subr.mxu0 0.0
        %1122 = vmatpush1.msra.mxu0 0.0
        %1123 = vmatprep.subr.mxu0 0.0
        %1124 = vmatpush1.msra.mxu0 0.0
        %1125 = vmatprep.mubr.f32.mxu0 0.0
        %v1126 = vand.u32 %v206, 4294901760
        %1127 = vmatmul.mubr.f32.gmra.mrb[0].mxu0 %v1126
        %v1128 = vpop.f32.mrb[0].mxu0
        %v1129 = vadd.f32 %v1000, %v1128
        %v1130 = vpop.f32.mrb[0].mxu0
        %1131 = vmatprep.mubr.f32.mxu0 0.0
        %v1132 = vand.u32 %v207, 4294901760
        %1133 = vmatmul.mubr.f32.gmra.mrb[0].mxu0 %v1132
        %v1134 = vpop.f32.mrb[0].mxu0
        %v1135 = vadd.f32 %v1006, %v1134
        %v1136 = vpop.f32.mrb[0].mxu0
        %1137 = vmatprep.mubr.f32.mxu0 0.0
        %v1138 = vand.u32 %v208, 4294901760
        %1139 = vmatmul.mubr.f32.gmra.mrb[0].mxu0 %v1138
        %v1140 = vpop.f32.mrb[0].mxu0
        %v1141 = vadd.f32 %v1012, %v1140
        %v1142 = vpop.f32.mrb[0].mxu0
        %1143 = vmatprep.mubr.f32.mxu0 0.0
        %v1144 = vand.u32 %v209, 4294901760
        %1145 = vmatmul.mubr.f32.gmra.mrb[0].mxu0 %v1144
        %v1146 = vpop.f32.mrb[0].mxu0
        %v1147 = vadd.f32 %v1018, %v1146
        %v1148 = vpop.f32.mrb[0].mxu0
        %1149 = vmatprep.mubr.f32.mxu0 0.0
        %v1150 = vand.u32 %v210, 4294901760
        %1151 = vmatmul.mubr.f32.gmra.mrb[0].mxu0 %v1150
        %v1152 = vpop.f32.mrb[0].mxu0
        %v1153 = vadd.f32 %v1024, %v1152
        %v1154 = vpop.f32.mrb[0].mxu0
        %1155 = vmatprep.mubr.f32.mxu0 0.0
        %v1156 = vand.u32 %v211, 4294901760
        %1157 = vmatmul.mubr.f32.gmra.mrb[0].mxu0 %v1156
        %v1158 = vpop.f32.mrb[0].mxu0
        %v1159 = vadd.f32 %v1030, %v1158
        %v1160 = vpop.f32.mrb[0].mxu0
        %1161 = vmatprep.mubr.f32.mxu0 0.0
        %v1162 = vand.u32 %v212, 4294901760
        %1163 = vmatmul.mubr.f32.gmra.mrb[0].mxu0 %v1162
        %v1164 = vpop.f32.mrb[0].mxu0
        %v1165 = vadd.f32 %v1036, %v1164
        %v1166 = vpop.f32.mrb[0].mxu0
        %1167 = vmatprep.mubr.f32.mxu0 0.0
        %v1168 = vand.u32 %v213, 4294901760
        %1169 = vmatmul.mubr.f32.gmra.mrb[0].mxu0 %v1168
        %v1170 = vpop.f32.mrb[0].mxu0
        %v1171 = vadd.f32 %v1042, %v1170
        %v1172 = vpop.f32.mrb[0].mxu0
        %1173 = vdwg.mxu0
        %v1174 = vmul.f32 %v206, %v206
        %v1175 = vmul.f32 %v207, %v207
        %v1176 = vmul.f32 %v208, %v208
        %v1177 = vmul.f32 %v209, %v209
        %v1178 = vmul.f32 %v210, %v210
        %v1179 = vmul.f32 %v211, %v211
        %v1180 = vmul.f32 %v212, %v212
        %v1181 = vmul.f32 %v213, %v213
        %1182 = vmatprep.subr.mxu0 0.0
        %v1183 = vand.u32 %v214, 4294901760
        %1184 = vmatpush1.msra.mxu0 %v1183
        %1185 = vmatprep.subr.mxu0 0.0
        %v1186 = vand.u32 %v215, 4294901760
        %1187 = vmatpush1.msra.mxu0 %v1186
        %1188 = vmatprep.subr.mxu0 0.0
        %v1189 = vand.u32 %v216, 4294901760
        %1190 = vmatpush1.msra.mxu0 %v1189
        %1191 = vmatprep.subr.mxu0 0.0
        %v1192 = vand.u32 %v217, 4294901760
        %1193 = vmatpush1.msra.mxu0 %v1192
        %1194 = vmatprep.subr.mxu0 0.0
        %v1195 = vand.u32 %v218, 4294901760
        %1196 = vmatpush1.msra.mxu0 %v1195
        %1197 = vmatprep.subr.mxu0 0.0
        %v1198 = vand.u32 %v219, 4294901760
        %1199 = vmatpush1.msra.mxu0 %v1198
        %1200 = vmatprep.subr.mxu0 0.0
        %v1201 = vand.u32 %v220, 4294901760
        %1202 = vmatpush1.msra.mxu0 %v1201
        %1203 = vmatprep.subr.mxu0 0.0
        %v1204 = vand.u32 %v221, 4294901760
        %1205 = vmatpush1.msra.mxu0 %v1204
        %1206 = vmatprep.subr.mxu0 0.0
        %v1207 = vand.u32 %v222, 4294901760
        %1208 = vmatpush1.msra.mxu0 %v1207
        %1209 = vmatprep.subr.mxu0 0.0
        %v1210 = vand.u32 %v223, 4294901760
        %1211 = vmatpush1.msra.mxu0 %v1210
        %1212 = vmatprep.subr.mxu0 0.0
        %v1213 = vand.u32 %v224, 4294901760
        %1214 = vmatpush1.msra.mxu0 %v1213
        %1215 = vmatprep.subr.mxu0 0.0
        %v1216 = vand.u32 %v225, 4294901760
        %1217 = vmatpush1.msra.mxu0 %v1216
        %1218 = vmatprep.subr.mxu0 0.0
        %v1219 = vand.u32 %v226, 4294901760
        %1220 = vmatpush1.msra.mxu0 %v1219
        %1221 = vmatprep.subr.mxu0 0.0
        %v1222 = vand.u32 %v227, 4294901760
        %1223 = vmatpush1.msra.mxu0 %v1222
        %1224 = vmatprep.subr.mxu0 0.0
        %v1225 = vand.u32 %v228, 4294901760
        %1226 = vmatpush1.msra.mxu0 %v1225
        %1227 = vmatprep.subr.mxu0 0.0
        %v1228 = vand.u32 %v229, 4294901760
        %1229 = vmatpush1.msra.mxu0 %v1228
        %1230 = vmatprep.subr.mxu0 0.0
        %1231 = vmatpush1.msra.mxu0 0.0
        %1232 = vmatprep.subr.mxu0 0.0
        %1233 = vmatpush1.msra.mxu0 0.0
        %1234 = vmatprep.subr.mxu0 0.0
        %1235 = vmatpush1.msra.mxu0 0.0
        %1236 = vmatprep.subr.mxu0 0.0
        %1237 = vmatpush1.msra.mxu0 0.0
        %1238 = vmatprep.subr.mxu0 0.0
        %1239 = vmatpush1.msra.mxu0 0.0
        %1240 = vmatprep.subr.mxu0 0.0
        %1241 = vmatpush1.msra.mxu0 0.0
        %1242 = vmatprep.subr.mxu0 0.0
        %1243 = vmatpush1.msra.mxu0 0.0
        %1244 = vmatprep.subr.mxu0 0.0
        %1245 = vmatpush1.msra.mxu0 0.0
        %1246 = vmatprep.subr.mxu0 0.0
        %1247 = vmatpush1.msra.mxu0 0.0
        %1248 = vmatprep.subr.mxu0 0.0
        %1249 = vmatpush1.msra.mxu0 0.0
        %1250 = vmatprep.subr.mxu0 0.0
        %1251 = vmatpush1.msra.mxu0 0.0
        %1252 = vmatprep.subr.mxu0 0.0
        %1253 = vmatpush1.msra.mxu0 0.0
        %1254 = vmatprep.subr.mxu0 0.0
        %1255 = vmatpush1.msra.mxu0 0.0
        %1256 = vmatprep.subr.mxu0 0.0
        %1257 = vmatpush1.msra.mxu0 0.0
        %1258 = vmatprep.subr.mxu0 0.0
        %1259 = vmatpush1.msra.mxu0 0.0
        %1260 = vmatprep.subr.mxu0 0.0
        %1261 = vmatpush1.msra.mxu0 0.0
        %1262 = vmatprep.mubr.f32.mxu0 0.0
        %v1263 = vand.u32 %v1174, 4294901760
        %v1264 = vsub.f32 %v1174, %v1263
        %v1265 = vand.u32 %v1264, 4294901760
        %v1266 = vsub.f32 %v1264, %v1265
        %v1267 = vand.u32 %v1266, 4294901760
        %1268 = vmatmul.mubr.f32.gmra.mrb[0].mxu0 %v1267
        %v1269 = vpop.f32.mrb[0].mxu0
        %v1270 = vadd.f32 0.0, %v1269
        %v1271 = vpop.f32.mrb[0].mxu0
        %1272 = vmatprep.mubr.f32.mxu0 0.0
        %v1273 = vand.u32 %v1175, 4294901760
        %v1274 = vsub.f32 %v1175, %v1273
        %v1275 = vand.u32 %v1274, 4294901760
        %v1276 = vsub.f32 %v1274, %v1275
        %v1277 = vand.u32 %v1276, 4294901760
        %1278 = vmatmul.mubr.f32.gmra.mrb[0].mxu0 %v1277
        %v1279 = vpop.f32.mrb[0].mxu0
        %v1280 = vadd.f32 0.0, %v1279
        %v1281 = vpop.f32.mrb[0].mxu0
        %1282 = vmatprep.mubr.f32.mxu0 0.0
        %v1283 = vand.u32 %v1176, 4294901760
        %v1284 = vsub.f32 %v1176, %v1283
        %v1285 = vand.u32 %v1284, 4294901760
        %v1286 = vsub.f32 %v1284, %v1285
        %v1287 = vand.u32 %v1286, 4294901760
        %1288 = vmatmul.mubr.f32.gmra.mrb[0].mxu0 %v1287
        %v1289 = vpop.f32.mrb[0].mxu0
        %v1290 = vadd.f32 0.0, %v1289
        %v1291 = vpop.f32.mrb[0].mxu0
        %1292 = vmatprep.mubr.f32.mxu0 0.0
        %v1293 = vand.u32 %v1177, 4294901760
        %v1294 = vsub.f32 %v1177, %v1293
        %v1295 = vand.u32 %v1294, 4294901760
        %v1296 = vsub.f32 %v1294, %v1295
        %v1297 = vand.u32 %v1296, 4294901760
        %1298 = vmatmul.mubr.f32.gmra.mrb[0].mxu0 %v1297
        %v1299 = vpop.f32.mrb[0].mxu0
        %v1300 = vadd.f32 0.0, %v1299
        %v1301 = vpop.f32.mrb[0].mxu0
        %1302 = vmatprep.mubr.f32.mxu0 0.0
        %v1303 = vand.u32 %v1178, 4294901760
        %v1304 = vsub.f32 %v1178, %v1303
        %v1305 = vand.u32 %v1304, 4294901760
        %v1306 = vsub.f32 %v1304, %v1305
        %v1307 = vand.u32 %v1306, 4294901760
        %1308 = vmatmul.mubr.f32.gmra.mrb[0].mxu0 %v1307
        %v1309 = vpop.f32.mrb[0].mxu0
        %v1310 = vadd.f32 0.0, %v1309
        %v1311 = vpop.f32.mrb[0].mxu0
        %1312 = vmatprep.mubr.f32.mxu0 0.0
        %v1313 = vand.u32 %v1179, 4294901760
        %v1314 = vsub.f32 %v1179, %v1313
        %v1315 = vand.u32 %v1314, 4294901760
        %v1316 = vsub.f32 %v1314, %v1315
        %v1317 = vand.u32 %v1316, 4294901760
        %1318 = vmatmul.mubr.f32.gmra.mrb[0].mxu0 %v1317
        %v1319 = vpop.f32.mrb[0].mxu0
        %v1320 = vadd.f32 0.0, %v1319
        %v1321 = vpop.f32.mrb[0].mxu0
        %1322 = vmatprep.mubr.f32.mxu0 0.0
        %v1323 = vand.u32 %v1180, 4294901760
        %v1324 = vsub.f32 %v1180, %v1323
        %v1325 = vand.u32 %v1324, 4294901760
        %v1326 = vsub.f32 %v1324, %v1325
        %v1327 = vand.u32 %v1326, 4294901760
        %1328 = vmatmul.mubr.f32.gmra.mrb[0].mxu0 %v1327
        %v1329 = vpop.f32.mrb[0].mxu0
        %v1330 = vadd.f32 0.0, %v1329
        %v1331 = vpop.f32.mrb[0].mxu0
        %1332 = vmatprep.mubr.f32.mxu0 0.0
        %v1333 = vand.u32 %v1181, 4294901760
        %v1334 = vsub.f32 %v1181, %v1333
        %v1335 = vand.u32 %v1334, 4294901760
        %v1336 = vsub.f32 %v1334, %v1335
        %v1337 = vand.u32 %v1336, 4294901760
        %1338 = vmatmul.mubr.f32.gmra.mrb[0].mxu0 %v1337
        %v1339 = vpop.f32.mrb[0].mxu0
        %v1340 = vadd.f32 0.0, %v1339
        %v1341 = vpop.f32.mrb[0].mxu0
        %1342 = vdwg.mxu0
        %1343 = vmatprep.subr.mxu0 0.0
        %v1344 = vand.u32 %v214, 4294901760
        %v1345 = vsub.f32 %v214, %v1344
        %v1346 = vand.u32 %v1345, 4294901760
        %v1347 = vsub.f32 %v1345, %v1346
        %v1348 = vand.u32 %v1347, 4294901760
        %1349 = vmatpush1.msra.mxu0 %v1348
        %1350 = vmatprep.subr.mxu0 0.0
        %v1351 = vand.u32 %v215, 4294901760
        %v1352 = vsub.f32 %v215, %v1351
        %v1353 = vand.u32 %v1352, 4294901760
        %v1354 = vsub.f32 %v1352, %v1353
        %v1355 = vand.u32 %v1354, 4294901760
        %1356 = vmatpush1.msra.mxu0 %v1355
        %1357 = vmatprep.subr.mxu0 0.0
        %v1358 = vand.u32 %v216, 4294901760
        %v1359 = vsub.f32 %v216, %v1358
        %v1360 = vand.u32 %v1359, 4294901760
        %v1361 = vsub.f32 %v1359, %v1360
        %v1362 = vand.u32 %v1361, 4294901760
        %1363 = vmatpush1.msra.mxu0 %v1362
        %1364 = vmatprep.subr.mxu0 0.0
        %v1365 = vand.u32 %v217, 4294901760
        %v1366 = vsub.f32 %v217, %v1365
        %v1367 = vand.u32 %v1366, 4294901760
        %v1368 = vsub.f32 %v1366, %v1367
        %v1369 = vand.u32 %v1368, 4294901760
        %1370 = vmatpush1.msra.mxu0 %v1369
        %1371 = vmatprep.subr.mxu0 0.0
        %v1372 = vand.u32 %v218, 4294901760
        %v1373 = vsub.f32 %v218, %v1372
        %v1374 = vand.u32 %v1373, 4294901760
        %v1375 = vsub.f32 %v1373, %v1374
        %v1376 = vand.u32 %v1375, 4294901760
        %1377 = vmatpush1.msra.mxu0 %v1376
        %1378 = vmatprep.subr.mxu0 0.0
        %v1379 = vand.u32 %v219, 4294901760
        %v1380 = vsub.f32 %v219, %v1379
        %v1381 = vand.u32 %v1380, 4294901760
        %v1382 = vsub.f32 %v1380, %v1381
        %v1383 = vand.u32 %v1382, 4294901760
        %1384 = vmatpush1.msra.mxu0 %v1383
        %1385 = vmatprep.subr.mxu0 0.0
        %v1386 = vand.u32 %v220, 4294901760
        %v1387 = vsub.f32 %v220, %v1386
        %v1388 = vand.u32 %v1387, 4294901760
        %v1389 = vsub.f32 %v1387, %v1388
        %v1390 = vand.u32 %v1389, 4294901760
        %1391 = vmatpush1.msra.mxu0 %v1390
        %1392 = vmatprep.subr.mxu0 0.0
        %v1393 = vand.u32 %v221, 4294901760
        %v1394 = vsub.f32 %v221, %v1393
        %v1395 = vand.u32 %v1394, 4294901760
        %v1396 = vsub.f32 %v1394, %v1395
        %v1397 = vand.u32 %v1396, 4294901760
        %1398 = vmatpush1.msra.mxu0 %v1397
        %1399 = vmatprep.subr.mxu0 0.0
        %v1400 = vand.u32 %v222, 4294901760
        %v1401 = vsub.f32 %v222, %v1400
        %v1402 = vand.u32 %v1401, 4294901760
        %v1403 = vsub.f32 %v1401, %v1402
        %v1404 = vand.u32 %v1403, 4294901760
        %1405 = vmatpush1.msra.mxu0 %v1404
        %1406 = vmatprep.subr.mxu0 0.0
        %v1407 = vand.u32 %v223, 4294901760
        %v1408 = vsub.f32 %v223, %v1407
        %v1409 = vand.u32 %v1408, 4294901760
        %v1410 = vsub.f32 %v1408, %v1409
        %v1411 = vand.u32 %v1410, 4294901760
        %1412 = vmatpush1.msra.mxu0 %v1411
        %1413 = vmatprep.subr.mxu0 0.0
        %v1414 = vand.u32 %v224, 4294901760
        %v1415 = vsub.f32 %v224, %v1414
        %v1416 = vand.u32 %v1415, 4294901760
        %v1417 = vsub.f32 %v1415, %v1416
        %v1418 = vand.u32 %v1417, 4294901760
        %1419 = vmatpush1.msra.mxu0 %v1418
        %1420 = vmatprep.subr.mxu0 0.0
        %v1421 = vand.u32 %v225, 4294901760
        %v1422 = vsub.f32 %v225, %v1421
        %v1423 = vand.u32 %v1422, 4294901760
        %v1424 = vsub.f32 %v1422, %v1423
        %v1425 = vand.u32 %v1424, 4294901760
        %1426 = vmatpush1.msra.mxu0 %v1425
        %1427 = vmatprep.subr.mxu0 0.0
        %v1428 = vand.u32 %v226, 4294901760
        %v1429 = vsub.f32 %v226, %v1428
        %v1430 = vand.u32 %v1429, 4294901760
        %v1431 = vsub.f32 %v1429, %v1430
        %v1432 = vand.u32 %v1431, 4294901760
        %1433 = vmatpush1.msra.mxu0 %v1432
        %1434 = vmatprep.subr.mxu0 0.0
        %v1435 = vand.u32 %v227, 4294901760
        %v1436 = vsub.f32 %v227, %v1435
        %v1437 = vand.u32 %v1436, 4294901760
        %v1438 = vsub.f32 %v1436, %v1437
        %v1439 = vand.u32 %v1438, 4294901760
        %1440 = vmatpush1.msra.mxu0 %v1439
        %1441 = vmatprep.subr.mxu0 0.0
        %v1442 = vand.u32 %v228, 4294901760
        %v1443 = vsub.f32 %v228, %v1442
        %v1444 = vand.u32 %v1443, 4294901760
        %v1445 = vsub.f32 %v1443, %v1444
        %v1446 = vand.u32 %v1445, 4294901760
        %1447 = vmatpush1.msra.mxu0 %v1446
        %1448 = vmatprep.subr.mxu0 0.0
        %v1449 = vand.u32 %v229, 4294901760
        %v1450 = vsub.f32 %v229, %v1449
        %v1451 = vand.u32 %v1450, 4294901760
        %v1452 = vsub.f32 %v1450, %v1451
        %v1453 = vand.u32 %v1452, 4294901760
        %1454 = vmatpush1.msra.mxu0 %v1453
        %1455 = vmatprep.subr.mxu0 0.0
        %1456 = vmatpush1.msra.mxu0 0.0
        %1457 = vmatprep.subr.mxu0 0.0
        %1458 = vmatpush1.msra.mxu0 0.0
        %1459 = vmatprep.subr.mxu0 0.0
        %1460 = vmatpush1.msra.mxu0 0.0
        %1461 = vmatprep.subr.mxu0 0.0
        %1462 = vmatpush1.msra.mxu0 0.0
        %1463 = vmatprep.subr.mxu0 0.0
        %1464 = vmatpush1.msra.mxu0 0.0
        %1465 = vmatprep.subr.mxu0 0.0
        %1466 = vmatpush1.msra.mxu0 0.0
        %1467 = vmatprep.subr.mxu0 0.0
        %1468 = vmatpush1.msra.mxu0 0.0
        %1469 = vmatprep.subr.mxu0 0.0
        %1470 = vmatpush1.msra.mxu0 0.0
        %1471 = vmatprep.subr.mxu0 0.0
        %1472 = vmatpush1.msra.mxu0 0.0
        %1473 = vmatprep.subr.mxu0 0.0
        %1474 = vmatpush1.msra.mxu0 0.0
        %1475 = vmatprep.subr.mxu0 0.0
        %1476 = vmatpush1.msra.mxu0 0.0
        %1477 = vmatprep.subr.mxu0 0.0
        %1478 = vmatpush1.msra.mxu0 0.0
        %1479 = vmatprep.subr.mxu0 0.0
        %1480 = vmatpush1.msra.mxu0 0.0
        %1481 = vmatprep.subr.mxu0 0.0
        %1482 = vmatpush1.msra.mxu0 0.0
        %1483 = vmatprep.subr.mxu0 0.0
        %1484 = vmatpush1.msra.mxu0 0.0
        %1485 = vmatprep.subr.mxu0 0.0
        %1486 = vmatpush1.msra.mxu0 0.0
        %1487 = vmatprep.mubr.f32.mxu0 0.0
        %v1488 = vand.u32 %v1174, 4294901760
        %1489 = vmatmul.mubr.f32.gmra.mrb[0].mxu0 %v1488
        %v1490 = vpop.f32.mrb[0].mxu0
        %v1491 = vadd.f32 %v1270, %v1490
        %v1492 = vpop.f32.mrb[0].mxu0
        %1493 = vmatprep.mubr.f32.mxu0 0.0
        %v1494 = vand.u32 %v1175, 4294901760
        %1495 = vmatmul.mubr.f32.gmra.mrb[0].mxu0 %v1494
        %v1496 = vpop.f32.mrb[0].mxu0
        %v1497 = vadd.f32 %v1280, %v1496
        %v1498 = vpop.f32.mrb[0].mxu0
        %1499 = vmatprep.mubr.f32.mxu0 0.0
        %v1500 = vand.u32 %v1176, 4294901760
        %1501 = vmatmul.mubr.f32.gmra.mrb[0].mxu0 %v1500
        %v1502 = vpop.f32.mrb[0].mxu0
        %v1503 = vadd.f32 %v1290, %v1502
        %v1504 = vpop.f32.mrb[0].mxu0
        %1505 = vmatprep.mubr.f32.mxu0 0.0
        %v1506 = vand.u32 %v1177, 4294901760
        %1507 = vmatmul.mubr.f32.gmra.mrb[0].mxu0 %v1506
        %v1508 = vpop.f32.mrb[0].mxu0
        %v1509 = vadd.f32 %v1300, %v1508
        %v1510 = vpop.f32.mrb[0].mxu0
        %1511 = vmatprep.mubr.f32.mxu0 0.0
        %v1512 = vand.u32 %v1178, 4294901760
        %1513 = vmatmul.mubr.f32.gmra.mrb[0].mxu0 %v1512
        %v1514 = vpop.f32.mrb[0].mxu0
        %v1515 = vadd.f32 %v1310, %v1514
        %v1516 = vpop.f32.mrb[0].mxu0
        %1517 = vmatprep.mubr.f32.mxu0 0.0
        %v1518 = vand.u32 %v1179, 4294901760
        %1519 = vmatmul.mubr.f32.gmra.mrb[0].mxu0 %v1518
        %v1520 = vpop.f32.mrb[0].mxu0
        %v1521 = vadd.f32 %v1320, %v1520
        %v1522 = vpop.f32.mrb[0].mxu0
        %1523 = vmatprep.mubr.f32.mxu0 0.0
        %v1524 = vand.u32 %v1180, 4294901760
        %1525 = vmatmul.mubr.f32.gmra.mrb[0].mxu0 %v1524
        %v1526 = vpop.f32.mrb[0].mxu0
        %v1527 = vadd.f32 %v1330, %v1526
        %v1528 = vpop.f32.mrb[0].mxu0
        %1529 = vmatprep.mubr.f32.mxu0 0.0
        %v1530 = vand.u32 %v1181, 4294901760
        %1531 = vmatmul.mubr.f32.gmra.mrb[0].mxu0 %v1530
        %v1532 = vpop.f32.mrb[0].mxu0
        %v1533 = vadd.f32 %v1340, %v1532
        %v1534 = vpop.f32.mrb[0].mxu0
        %1535 = vdwg.mxu0
        %1536 = vmatprep.subr.mxu0 0.0
        %v1537 = vand.u32 %v214, 4294901760
        %v1538 = vsub.f32 %v214, %v1537
        %1539 = vmatpush1.msra.mxu0 %v1538
        %1540 = vmatprep.subr.mxu0 0.0
        %v1541 = vand.u32 %v215, 4294901760
        %v1542 = vsub.f32 %v215, %v1541
        %1543 = vmatpush1.msra.mxu0 %v1542
        %1544 = vmatprep.subr.mxu0 0.0
        %v1545 = vand.u32 %v216, 4294901760
        %v1546 = vsub.f32 %v216, %v1545
        %1547 = vmatpush1.msra.mxu0 %v1546
        %1548 = vmatprep.subr.mxu0 0.0
        %v1549 = vand.u32 %v217, 4294901760
        %v1550 = vsub.f32 %v217, %v1549
        %1551 = vmatpush1.msra.mxu0 %v1550
        %1552 = vmatprep.subr.mxu0 0.0
        %v1553 = vand.u32 %v218, 4294901760
        %v1554 = vsub.f32 %v218, %v1553
        %1555 = vmatpush1.msra.mxu0 %v1554
        %1556 = vmatprep.subr.mxu0 0.0
        %v1557 = vand.u32 %v219, 4294901760
        %v1558 = vsub.f32 %v219, %v1557
        %1559 = vmatpush1.msra.mxu0 %v1558
        %1560 = vmatprep.subr.mxu0 0.0
        %v1561 = vand.u32 %v220, 4294901760
        %v1562 = vsub.f32 %v220, %v1561
        %1563 = vmatpush1.msra.mxu0 %v1562
        %1564 = vmatprep.subr.mxu0 0.0
        %v1565 = vand.u32 %v221, 4294901760
        %v1566 = vsub.f32 %v221, %v1565
        %1567 = vmatpush1.msra.mxu0 %v1566
        %1568 = vmatprep.subr.mxu0 0.0
        %v1569 = vand.u32 %v222, 4294901760
        %v1570 = vsub.f32 %v222, %v1569
        %1571 = vmatpush1.msra.mxu0 %v1570
        %1572 = vmatprep.subr.mxu0 0.0
        %v1573 = vand.u32 %v223, 4294901760
        %v1574 = vsub.f32 %v223, %v1573
        %1575 = vmatpush1.msra.mxu0 %v1574
        %1576 = vmatprep.subr.mxu0 0.0
        %v1577 = vand.u32 %v224, 4294901760
        %v1578 = vsub.f32 %v224, %v1577
        %1579 = vmatpush1.msra.mxu0 %v1578
        %1580 = vmatprep.subr.mxu0 0.0
        %v1581 = vand.u32 %v225, 4294901760
        %v1582 = vsub.f32 %v225, %v1581
        %1583 = vmatpush1.msra.mxu0 %v1582
        %1584 = vmatprep.subr.mxu0 0.0
        %v1585 = vand.u32 %v226, 4294901760
        %v1586 = vsub.f32 %v226, %v1585
        %1587 = vmatpush1.msra.mxu0 %v1586
        %1588 = vmatprep.subr.mxu0 0.0
        %v1589 = vand.u32 %v227, 4294901760
        %v1590 = vsub.f32 %v227, %v1589
        %1591 = vmatpush1.msra.mxu0 %v1590
        %1592 = vmatprep.subr.mxu0 0.0
        %v1593 = vand.u32 %v228, 4294901760
        %v1594 = vsub.f32 %v228, %v1593
        %1595 = vmatpush1.msra.mxu0 %v1594
        %1596 = vmatprep.subr.mxu0 0.0
        %v1597 = vand.u32 %v229, 4294901760
        %v1598 = vsub.f32 %v229, %v1597
        %1599 = vmatpush1.msra.mxu0 %v1598
        %1600 = vmatprep.subr.mxu0 0.0
        %1601 = vmatpush1.msra.mxu0 0.0
        %1602 = vmatprep.subr.mxu0 0.0
        %1603 = vmatpush1.msra.mxu0 0.0
        %1604 = vmatprep.subr.mxu0 0.0
        %1605 = vmatpush1.msra.mxu0 0.0
        %1606 = vmatprep.subr.mxu0 0.0
        %1607 = vmatpush1.msra.mxu0 0.0
        %1608 = vmatprep.subr.mxu0 0.0
        %1609 = vmatpush1.msra.mxu0 0.0
        %1610 = vmatprep.subr.mxu0 0.0
        %1611 = vmatpush1.msra.mxu0 0.0
        %1612 = vmatprep.subr.mxu0 0.0
        %1613 = vmatpush1.msra.mxu0 0.0
        %1614 = vmatprep.subr.mxu0 0.0
        %1615 = vmatpush1.msra.mxu0 0.0
        %1616 = vmatprep.subr.mxu0 0.0
        %1617 = vmatpush1.msra.mxu0 0.0
        %1618 = vmatprep.subr.mxu0 0.0
        %1619 = vmatpush1.msra.mxu0 0.0
        %1620 = vmatprep.subr.mxu0 0.0
        %1621 = vmatpush1.msra.mxu0 0.0
        %1622 = vmatprep.subr.mxu0 0.0
        %1623 = vmatpush1.msra.mxu0 0.0
        %1624 = vmatprep.subr.mxu0 0.0
        %1625 = vmatpush1.msra.mxu0 0.0
        %1626 = vmatprep.subr.mxu0 0.0
        %1627 = vmatpush1.msra.mxu0 0.0
        %1628 = vmatprep.subr.mxu0 0.0
        %1629 = vmatpush1.msra.mxu0 0.0
        %1630 = vmatprep.subr.mxu0 0.0
        %1631 = vmatpush1.msra.mxu0 0.0
        %1632 = vmatprep.mubr.f32.mxu0 0.0
        %v1633 = vand.u32 %v1174, 4294901760
        %v1634 = vsub.f32 %v1174, %v1633
        %1635 = vmatmul.mubr.f32.gmra.mrb[0].mxu0 %v1634
        %v1636 = vpop.f32.mrb[0].mxu0
        %v1637 = vadd.f32 %v1491, %v1636
        %v1638 = vpop.f32.mrb[0].mxu0
        %1639 = vmatprep.mubr.f32.mxu0 0.0
        %v1640 = vand.u32 %v1175, 4294901760
        %v1641 = vsub.f32 %v1175, %v1640
        %1642 = vmatmul.mubr.f32.gmra.mrb[0].mxu0 %v1641
        %v1643 = vpop.f32.mrb[0].mxu0
        %v1644 = vadd.f32 %v1497, %v1643
        %v1645 = vpop.f32.mrb[0].mxu0
        %1646 = vmatprep.mubr.f32.mxu0 0.0
        %v1647 = vand.u32 %v1176, 4294901760
        %v1648 = vsub.f32 %v1176, %v1647
        %1649 = vmatmul.mubr.f32.gmra.mrb[0].mxu0 %v1648
        %v1650 = vpop.f32.mrb[0].mxu0
        %v1651 = vadd.f32 %v1503, %v1650
        %v1652 = vpop.f32.mrb[0].mxu0
        %1653 = vmatprep.mubr.f32.mxu0 0.0
        %v1654 = vand.u32 %v1177, 4294901760
        %v1655 = vsub.f32 %v1177, %v1654
        %1656 = vmatmul.mubr.f32.gmra.mrb[0].mxu0 %v1655
        %v1657 = vpop.f32.mrb[0].mxu0
        %v1658 = vadd.f32 %v1509, %v1657
        %v1659 = vpop.f32.mrb[0].mxu0
        %1660 = vmatprep.mubr.f32.mxu0 0.0
        %v1661 = vand.u32 %v1178, 4294901760
        %v1662 = vsub.f32 %v1178, %v1661
        %1663 = vmatmul.mubr.f32.gmra.mrb[0].mxu0 %v1662
        %v1664 = vpop.f32.mrb[0].mxu0
        %v1665 = vadd.f32 %v1515, %v1664
        %v1666 = vpop.f32.mrb[0].mxu0
        %1667 = vmatprep.mubr.f32.mxu0 0.0
        %v1668 = vand.u32 %v1179, 4294901760
        %v1669 = vsub.f32 %v1179, %v1668
        %1670 = vmatmul.mubr.f32.gmra.mrb[0].mxu0 %v1669
        %v1671 = vpop.f32.mrb[0].mxu0
        %v1672 = vadd.f32 %v1521, %v1671
        %v1673 = vpop.f32.mrb[0].mxu0
        %1674 = vmatprep.mubr.f32.mxu0 0.0
        %v1675 = vand.u32 %v1180, 4294901760
        %v1676 = vsub.f32 %v1180, %v1675
        %1677 = vmatmul.mubr.f32.gmra.mrb[0].mxu0 %v1676
        %v1678 = vpop.f32.mrb[0].mxu0
        %v1679 = vadd.f32 %v1527, %v1678
        %v1680 = vpop.f32.mrb[0].mxu0
        %1681 = vmatprep.mubr.f32.mxu0 0.0
        %v1682 = vand.u32 %v1181, 4294901760
        %v1683 = vsub.f32 %v1181, %v1682
        %1684 = vmatmul.mubr.f32.gmra.mrb[0].mxu0 %v1683
        %v1685 = vpop.f32.mrb[0].mxu0
        %v1686 = vadd.f32 %v1533, %v1685
        %v1687 = vpop.f32.mrb[0].mxu0
        %1688 = vdwg.mxu0
        %1689 = vmatprep.subr.mxu0 0.0
        %v1690 = vand.u32 %v214, 4294901760
        %1691 = vmatpush1.msra.mxu0 %v1690
        %1692 = vmatprep.subr.mxu0 0.0
        %v1693 = vand.u32 %v215, 4294901760
        %1694 = vmatpush1.msra.mxu0 %v1693
        %1695 = vmatprep.subr.mxu0 0.0
        %v1696 = vand.u32 %v216, 4294901760
        %1697 = vmatpush1.msra.mxu0 %v1696
        %1698 = vmatprep.subr.mxu0 0.0
        %v1699 = vand.u32 %v217, 4294901760
        %1700 = vmatpush1.msra.mxu0 %v1699
        %1701 = vmatprep.subr.mxu0 0.0
        %v1702 = vand.u32 %v218, 4294901760
        %1703 = vmatpush1.msra.mxu0 %v1702
        %1704 = vmatprep.subr.mxu0 0.0
        %v1705 = vand.u32 %v219, 4294901760
        %1706 = vmatpush1.msra.mxu0 %v1705
        %1707 = vmatprep.subr.mxu0 0.0
        %v1708 = vand.u32 %v220, 4294901760
        %1709 = vmatpush1.msra.mxu0 %v1708
        %1710 = vmatprep.subr.mxu0 0.0
        %v1711 = vand.u32 %v221, 4294901760
        %1712 = vmatpush1.msra.mxu0 %v1711
        %1713 = vmatprep.subr.mxu0 0.0
        %v1714 = vand.u32 %v222, 4294901760
        %1715 = vmatpush1.msra.mxu0 %v1714
        %1716 = vmatprep.subr.mxu0 0.0
        %v1717 = vand.u32 %v223, 4294901760
        %1718 = vmatpush1.msra.mxu0 %v1717
        %1719 = vmatprep.subr.mxu0 0.0
        %v1720 = vand.u32 %v224, 4294901760
        %1721 = vmatpush1.msra.mxu0 %v1720
        %1722 = vmatprep.subr.mxu0 0.0
        %v1723 = vand.u32 %v225, 4294901760
        %1724 = vmatpush1.msra.mxu0 %v1723
        %1725 = vmatprep.subr.mxu0 0.0
        %v1726 = vand.u32 %v226, 4294901760
        %1727 = vmatpush1.msra.mxu0 %v1726
        %1728 = vmatprep.subr.mxu0 0.0
        %v1729 = vand.u32 %v227, 4294901760
        %1730 = vmatpush1.msra.mxu0 %v1729
        %1731 = vmatprep.subr.mxu0 0.0
        %v1732 = vand.u32 %v228, 4294901760
        %1733 = vmatpush1.msra.mxu0 %v1732
        %1734 = vmatprep.subr.mxu0 0.0
        %v1735 = vand.u32 %v229, 4294901760
        %1736 = vmatpush1.msra.mxu0 %v1735
        %1737 = vmatprep.subr.mxu0 0.0
        %1738 = vmatpush1.msra.mxu0 0.0
        %1739 = vmatprep.subr.mxu0 0.0
        %1740 = vmatpush1.msra.mxu0 0.0
        %1741 = vmatprep.subr.mxu0 0.0
        %1742 = vmatpush1.msra.mxu0 0.0
        %1743 = vmatprep.subr.mxu0 0.0
        %1744 = vmatpush1.msra.mxu0 0.0
        %1745 = vmatprep.subr.mxu0 0.0
        %1746 = vmatpush1.msra.mxu0 0.0
        %1747 = vmatprep.subr.mxu0 0.0
        %1748 = vmatpush1.msra.mxu0 0.0
        %1749 = vmatprep.subr.mxu0 0.0
        %1750 = vmatpush1.msra.mxu0 0.0
        %1751 = vmatprep.subr.mxu0 0.0
        %1752 = vmatpush1.msra.mxu0 0.0
        %1753 = vmatprep.subr.mxu0 0.0
        %1754 = vmatpush1.msra.mxu0 0.0
        %1755 = vmatprep.subr.mxu0 0.0
        %1756 = vmatpush1.msra.mxu0 0.0
        %1757 = vmatprep.subr.mxu0 0.0
        %1758 = vmatpush1.msra.mxu0 0.0
        %1759 = vmatprep.subr.mxu0 0.0
        %1760 = vmatpush1.msra.mxu0 0.0
        %1761 = vmatprep.subr.mxu0 0.0
        %1762 = vmatpush1.msra.mxu0 0.0
        %1763 = vmatprep.subr.mxu0 0.0
        %1764 = vmatpush1.msra.mxu0 0.0
        %1765 = vmatprep.subr.mxu0 0.0
        %1766 = vmatpush1.msra.mxu0 0.0
        %1767 = vmatprep.subr.mxu0 0.0
        %1768 = vmatpush1.msra.mxu0 0.0
        %1769 = vmatprep.mubr.f32.mxu0 0.0
        %v1770 = vand.u32 %v1174, 4294901760
        %v1771 = vsub.f32 %v1174, %v1770
        %v1772 = vand.u32 %v1771, 4294901760
        %1773 = vmatmul.mubr.f32.gmra.mrb[0].mxu0 %v1772
        %v1774 = vpop.f32.mrb[0].mxu0
        %v1775 = vadd.f32 %v1637, %v1774
        %v1776 = vpop.f32.mrb[0].mxu0
        %1777 = vmatprep.mubr.f32.mxu0 0.0
        %v1778 = vand.u32 %v1175, 4294901760
        %v1779 = vsub.f32 %v1175, %v1778
        %v1780 = vand.u32 %v1779, 4294901760
        %1781 = vmatmul.mubr.f32.gmra.mrb[0].mxu0 %v1780
        %v1782 = vpop.f32.mrb[0].mxu0
        %v1783 = vadd.f32 %v1644, %v1782
        %v1784 = vpop.f32.mrb[0].mxu0
        %1785 = vmatprep.mubr.f32.mxu0 0.0
        %v1786 = vand.u32 %v1176, 4294901760
        %v1787 = vsub.f32 %v1176, %v1786
        %v1788 = vand.u32 %v1787, 4294901760
        %1789 = vmatmul.mubr.f32.gmra.mrb[0].mxu0 %v1788
        %v1790 = vpop.f32.mrb[0].mxu0
        %v1791 = vadd.f32 %v1651, %v1790
        %v1792 = vpop.f32.mrb[0].mxu0
        %1793 = vmatprep.mubr.f32.mxu0 0.0
        %v1794 = vand.u32 %v1177, 4294901760
        %v1795 = vsub.f32 %v1177, %v1794
        %v1796 = vand.u32 %v1795, 4294901760
        %1797 = vmatmul.mubr.f32.gmra.mrb[0].mxu0 %v1796
        %v1798 = vpop.f32.mrb[0].mxu0
        %v1799 = vadd.f32 %v1658, %v1798
        %v1800 = vpop.f32.mrb[0].mxu0
        %1801 = vmatprep.mubr.f32.mxu0 0.0
        %v1802 = vand.u32 %v1178, 4294901760
        %v1803 = vsub.f32 %v1178, %v1802
        %v1804 = vand.u32 %v1803, 4294901760
        %1805 = vmatmul.mubr.f32.gmra.mrb[0].mxu0 %v1804
        %v1806 = vpop.f32.mrb[0].mxu0
        %v1807 = vadd.f32 %v1665, %v1806
        %v1808 = vpop.f32.mrb[0].mxu0
        %1809 = vmatprep.mubr.f32.mxu0 0.0
        %v1810 = vand.u32 %v1179, 4294901760
        %v1811 = vsub.f32 %v1179, %v1810
        %v1812 = vand.u32 %v1811, 4294901760
        %1813 = vmatmul.mubr.f32.gmra.mrb[0].mxu0 %v1812
        %v1814 = vpop.f32.mrb[0].mxu0
        %v1815 = vadd.f32 %v1672, %v1814
        %v1816 = vpop.f32.mrb[0].mxu0
        %1817 = vmatprep.mubr.f32.mxu0 0.0
        %v1818 = vand.u32 %v1180, 4294901760
        %v1819 = vsub.f32 %v1180, %v1818
        %v1820 = vand.u32 %v1819, 4294901760
        %1821 = vmatmul.mubr.f32.gmra.mrb[0].mxu0 %v1820
        %v1822 = vpop.f32.mrb[0].mxu0
        %v1823 = vadd.f32 %v1679, %v1822
        %v1824 = vpop.f32.mrb[0].mxu0
        %1825 = vmatprep.mubr.f32.mxu0 0.0
        %v1826 = vand.u32 %v1181, 4294901760
        %v1827 = vsub.f32 %v1181, %v1826
        %v1828 = vand.u32 %v1827, 4294901760
        %1829 = vmatmul.mubr.f32.gmra.mrb[0].mxu0 %v1828
        %v1830 = vpop.f32.mrb[0].mxu0
        %v1831 = vadd.f32 %v1686, %v1830
        %v1832 = vpop.f32.mrb[0].mxu0
        %1833 = vdwg.mxu0
        %1834 = vmatprep.subr.mxu0 0.0
        %v1835 = vand.u32 %v214, 4294901760
        %v1836 = vsub.f32 %v214, %v1835
        %v1837 = vand.u32 %v1836, 4294901760
        %1838 = vmatpush1.msra.mxu0 %v1837
        %1839 = vmatprep.subr.mxu0 0.0
        %v1840 = vand.u32 %v215, 4294901760
        %v1841 = vsub.f32 %v215, %v1840
        %v1842 = vand.u32 %v1841, 4294901760
        %1843 = vmatpush1.msra.mxu0 %v1842
        %1844 = vmatprep.subr.mxu0 0.0
        %v1845 = vand.u32 %v216, 4294901760
        %v1846 = vsub.f32 %v216, %v1845
        %v1847 = vand.u32 %v1846, 4294901760
        %1848 = vmatpush1.msra.mxu0 %v1847
        %1849 = vmatprep.subr.mxu0 0.0
        %v1850 = vand.u32 %v217, 4294901760
        %v1851 = vsub.f32 %v217, %v1850
        %v1852 = vand.u32 %v1851, 4294901760
        %1853 = vmatpush1.msra.mxu0 %v1852
        %1854 = vmatprep.subr.mxu0 0.0
        %v1855 = vand.u32 %v218, 4294901760
        %v1856 = vsub.f32 %v218, %v1855
        %v1857 = vand.u32 %v1856, 4294901760
        %1858 = vmatpush1.msra.mxu0 %v1857
        %1859 = vmatprep.subr.mxu0 0.0
        %v1860 = vand.u32 %v219, 4294901760
        %v1861 = vsub.f32 %v219, %v1860
        %v1862 = vand.u32 %v1861, 4294901760
        %1863 = vmatpush1.msra.mxu0 %v1862
        %1864 = vmatprep.subr.mxu0 0.0
        %v1865 = vand.u32 %v220, 4294901760
        %v1866 = vsub.f32 %v220, %v1865
        %v1867 = vand.u32 %v1866, 4294901760
        %1868 = vmatpush1.msra.mxu0 %v1867
        %1869 = vmatprep.subr.mxu0 0.0
        %v1870 = vand.u32 %v221, 4294901760
        %v1871 = vsub.f32 %v221, %v1870
        %v1872 = vand.u32 %v1871, 4294901760
        %1873 = vmatpush1.msra.mxu0 %v1872
        %1874 = vmatprep.subr.mxu0 0.0
        %v1875 = vand.u32 %v222, 4294901760
        %v1876 = vsub.f32 %v222, %v1875
        %v1877 = vand.u32 %v1876, 4294901760
        %1878 = vmatpush1.msra.mxu0 %v1877
        %1879 = vmatprep.subr.mxu0 0.0
        %v1880 = vand.u32 %v223, 4294901760
        %v1881 = vsub.f32 %v223, %v1880
        %v1882 = vand.u32 %v1881, 4294901760
        %1883 = vmatpush1.msra.mxu0 %v1882
        %1884 = vmatprep.subr.mxu0 0.0
        %v1885 = vand.u32 %v224, 4294901760
        %v1886 = vsub.f32 %v224, %v1885
        %v1887 = vand.u32 %v1886, 4294901760
        %1888 = vmatpush1.msra.mxu0 %v1887
        %1889 = vmatprep.subr.mxu0 0.0
        %v1890 = vand.u32 %v225, 4294901760
        %v1891 = vsub.f32 %v225, %v1890
        %v1892 = vand.u32 %v1891, 4294901760
        %1893 = vmatpush1.msra.mxu0 %v1892
        %1894 = vmatprep.subr.mxu0 0.0
        %v1895 = vand.u32 %v226, 4294901760
        %v1896 = vsub.f32 %v226, %v1895
        %v1897 = vand.u32 %v1896, 4294901760
        %1898 = vmatpush1.msra.mxu0 %v1897
        %1899 = vmatprep.subr.mxu0 0.0
        %v1900 = vand.u32 %v227, 4294901760
        %v1901 = vsub.f32 %v227, %v1900
        %v1902 = vand.u32 %v1901, 4294901760
        %1903 = vmatpush1.msra.mxu0 %v1902
        %1904 = vmatprep.subr.mxu0 0.0
        %v1905 = vand.u32 %v228, 4294901760
        %v1906 = vsub.f32 %v228, %v1905
        %v1907 = vand.u32 %v1906, 4294901760
        %1908 = vmatpush1.msra.mxu0 %v1907
        %1909 = vmatprep.subr.mxu0 0.0
        %v1910 = vand.u32 %v229, 4294901760
        %v1911 = vsub.f32 %v229, %v1910
        %v1912 = vand.u32 %v1911, 4294901760
        %1913 = vmatpush1.msra.mxu0 %v1912
        %1914 = vmatprep.subr.mxu0 0.0
        %1915 = vmatpush1.msra.mxu0 0.0
        %1916 = vmatprep.subr.mxu0 0.0
        %1917 = vmatpush1.msra.mxu0 0.0
        %1918 = vmatprep.subr.mxu0 0.0
        %1919 = vmatpush1.msra.mxu0 0.0
        %1920 = vmatprep.subr.mxu0 0.0
        %1921 = vmatpush1.msra.mxu0 0.0
        %1922 = vmatprep.subr.mxu0 0.0
        %1923 = vmatpush1.msra.mxu0 0.0
        %1924 = vmatprep.subr.mxu0 0.0
        %1925 = vmatpush1.msra.mxu0 0.0
        %1926 = vmatprep.subr.mxu0 0.0
        %1927 = vmatpush1.msra.mxu0 0.0
        %1928 = vmatprep.subr.mxu0 0.0
        %1929 = vmatpush1.msra.mxu0 0.0
        %1930 = vmatprep.subr.mxu0 0.0
        %1931 = vmatpush1.msra.mxu0 0.0
        %1932 = vmatprep.subr.mxu0 0.0
        %1933 = vmatpush1.msra.mxu0 0.0
        %1934 = vmatprep.subr.mxu0 0.0
        %1935 = vmatpush1.msra.mxu0 0.0
        %1936 = vmatprep.subr.mxu0 0.0
        %1937 = vmatpush1.msra.mxu0 0.0
        %1938 = vmatprep.subr.mxu0 0.0
        %1939 = vmatpush1.msra.mxu0 0.0
        %1940 = vmatprep.subr.mxu0 0.0
        %1941 = vmatpush1.msra.mxu0 0.0
        %1942 = vmatprep.subr.mxu0 0.0
        %1943 = vmatpush1.msra.mxu0 0.0
        %1944 = vmatprep.subr.mxu0 0.0
        %1945 = vmatpush1.msra.mxu0 0.0
        %1946 = vmatprep.mubr.f32.mxu0 0.0
        %v1947 = vand.u32 %v1174, 4294901760
        %1948 = vmatmul.mubr.f32.gmra.mrb[0].mxu0 %v1947
        %v1949 = vpop.f32.mrb[0].mxu0
        %v1950 = vadd.f32 %v1775, %v1949
        %v1951 = vpop.f32.mrb[0].mxu0
        %1952 = vmatprep.mubr.f32.mxu0 0.0
        %v1953 = vand.u32 %v1175, 4294901760
        %1954 = vmatmul.mubr.f32.gmra.mrb[0].mxu0 %v1953
        %v1955 = vpop.f32.mrb[0].mxu0
        %v1956 = vadd.f32 %v1783, %v1955
        %v1957 = vpop.f32.mrb[0].mxu0
        %1958 = vmatprep.mubr.f32.mxu0 0.0
        %v1959 = vand.u32 %v1176, 4294901760
        %1960 = vmatmul.mubr.f32.gmra.mrb[0].mxu0 %v1959
        %v1961 = vpop.f32.mrb[0].mxu0
        %v1962 = vadd.f32 %v1791, %v1961
        %v1963 = vpop.f32.mrb[0].mxu0
        %1964 = vmatprep.mubr.f32.mxu0 0.0
        %v1965 = vand.u32 %v1177, 4294901760
        %1966 = vmatmul.mubr.f32.gmra.mrb[0].mxu0 %v1965
        %v1967 = vpop.f32.mrb[0].mxu0
        %v1968 = vadd.f32 %v1799, %v1967
        %v1969 = vpop.f32.mrb[0].mxu0
        %1970 = vmatprep.mubr.f32.mxu0 0.0
        %v1971 = vand.u32 %v1178, 4294901760
        %1972 = vmatmul.mubr.f32.gmra.mrb[0].mxu0 %v1971
        %v1973 = vpop.f32.mrb[0].mxu0
        %v1974 = vadd.f32 %v1807, %v1973
        %v1975 = vpop.f32.mrb[0].mxu0
        %1976 = vmatprep.mubr.f32.mxu0 0.0
        %v1977 = vand.u32 %v1179, 4294901760
        %1978 = vmatmul.mubr.f32.gmra.mrb[0].mxu0 %v1977
        %v1979 = vpop.f32.mrb[0].mxu0
        %v1980 = vadd.f32 %v1815, %v1979
        %v1981 = vpop.f32.mrb[0].mxu0
        %1982 = vmatprep.mubr.f32.mxu0 0.0
        %v1983 = vand.u32 %v1180, 4294901760
        %1984 = vmatmul.mubr.f32.gmra.mrb[0].mxu0 %v1983
        %v1985 = vpop.f32.mrb[0].mxu0
        %v1986 = vadd.f32 %v1823, %v1985
        %v1987 = vpop.f32.mrb[0].mxu0
        %1988 = vmatprep.mubr.f32.mxu0 0.0
        %v1989 = vand.u32 %v1181, 4294901760
        %1990 = vmatmul.mubr.f32.gmra.mrb[0].mxu0 %v1989
        %v1991 = vpop.f32.mrb[0].mxu0
        %v1992 = vadd.f32 %v1831, %v1991
        %v1993 = vpop.f32.mrb[0].mxu0
        %1994 = vdwg.mxu0
        %1995 = vmatprep.subr.mxu0 0.0
        %v1996 = vand.u32 %v214, 4294901760
        %1997 = vmatpush1.msra.mxu0 %v1996
        %1998 = vmatprep.subr.mxu0 0.0
        %v1999 = vand.u32 %v215, 4294901760
        %2000 = vmatpush1.msra.mxu0 %v1999
        %2001 = vmatprep.subr.mxu0 0.0
        %v2002 = vand.u32 %v216, 4294901760
        %2003 = vmatpush1.msra.mxu0 %v2002
        %2004 = vmatprep.subr.mxu0 0.0
        %v2005 = vand.u32 %v217, 4294901760
        %2006 = vmatpush1.msra.mxu0 %v2005
        %2007 = vmatprep.subr.mxu0 0.0
        %v2008 = vand.u32 %v218, 4294901760
        %2009 = vmatpush1.msra.mxu0 %v2008
        %2010 = vmatprep.subr.mxu0 0.0
        %v2011 = vand.u32 %v219, 4294901760
        %2012 = vmatpush1.msra.mxu0 %v2011
        %2013 = vmatprep.subr.mxu0 0.0
        %v2014 = vand.u32 %v220, 4294901760
        %2015 = vmatpush1.msra.mxu0 %v2014
        %2016 = vmatprep.subr.mxu0 0.0
        %v2017 = vand.u32 %v221, 4294901760
        %2018 = vmatpush1.msra.mxu0 %v2017
        %2019 = vmatprep.subr.mxu0 0.0
        %v2020 = vand.u32 %v222, 4294901760
        %2021 = vmatpush1.msra.mxu0 %v2020
        %2022 = vmatprep.subr.mxu0 0.0
        %v2023 = vand.u32 %v223, 4294901760
        %2024 = vmatpush1.msra.mxu0 %v2023
        %2025 = vmatprep.subr.mxu0 0.0
        %v2026 = vand.u32 %v224, 4294901760
        %2027 = vmatpush1.msra.mxu0 %v2026
        %2028 = vmatprep.subr.mxu0 0.0
        %v2029 = vand.u32 %v225, 4294901760
        %2030 = vmatpush1.msra.mxu0 %v2029
        %2031 = vmatprep.subr.mxu0 0.0
        %v2032 = vand.u32 %v226, 4294901760
        %2033 = vmatpush1.msra.mxu0 %v2032
        %2034 = vmatprep.subr.mxu0 0.0
        %v2035 = vand.u32 %v227, 4294901760
        %2036 = vmatpush1.msra.mxu0 %v2035
        %2037 = vmatprep.subr.mxu0 0.0
        %v2038 = vand.u32 %v228, 4294901760
        %2039 = vmatpush1.msra.mxu0 %v2038
        %2040 = vmatprep.subr.mxu0 0.0
        %v2041 = vand.u32 %v229, 4294901760
        %2042 = vmatpush1.msra.mxu0 %v2041
        %2043 = vmatprep.subr.mxu0 0.0
        %2044 = vmatpush1.msra.mxu0 0.0
        %2045 = vmatprep.subr.mxu0 0.0
        %2046 = vmatpush1.msra.mxu0 0.0
        %2047 = vmatprep.subr.mxu0 0.0
        %2048 = vmatpush1.msra.mxu0 0.0
        %2049 = vmatprep.subr.mxu0 0.0
        %2050 = vmatpush1.msra.mxu0 0.0
        %2051 = vmatprep.subr.mxu0 0.0
        %2052 = vmatpush1.msra.mxu0 0.0
        %2053 = vmatprep.subr.mxu0 0.0
        %2054 = vmatpush1.msra.mxu0 0.0
        %2055 = vmatprep.subr.mxu0 0.0
        %2056 = vmatpush1.msra.mxu0 0.0
        %2057 = vmatprep.subr.mxu0 0.0
        %2058 = vmatpush1.msra.mxu0 0.0
        %2059 = vmatprep.subr.mxu0 0.0
        %2060 = vmatpush1.msra.mxu0 0.0
        %2061 = vmatprep.subr.mxu0 0.0
        %2062 = vmatpush1.msra.mxu0 0.0
        %2063 = vmatprep.subr.mxu0 0.0
        %2064 = vmatpush1.msra.mxu0 0.0
        %2065 = vmatprep.subr.mxu0 0.0
        %2066 = vmatpush1.msra.mxu0 0.0
        %2067 = vmatprep.subr.mxu0 0.0
        %2068 = vmatpush1.msra.mxu0 0.0
        %2069 = vmatprep.subr.mxu0 0.0
        %2070 = vmatpush1.msra.mxu0 0.0
        %2071 = vmatprep.subr.mxu0 0.0
        %2072 = vmatpush1.msra.mxu0 0.0
        %2073 = vmatprep.subr.mxu0 0.0
        %2074 = vmatpush1.msra.mxu0 0.0
        %2075 = vmatprep.mubr.f32.mxu0 0.0
        %v2076 = vand.u32 %v1174, 4294901760
        %2077 = vmatmul.mubr.f32.gmra.mrb[0].mxu0 %v2076
        %v2078 = vpop.f32.mrb[0].mxu0
        %v2079 = vadd.f32 %v1950, %v2078
        %v2080 = vpop.f32.mrb[0].mxu0
        %2081 = vmatprep.mubr.f32.mxu0 0.0
        %v2082 = vand.u32 %v1175, 4294901760
        %2083 = vmatmul.mubr.f32.gmra.mrb[0].mxu0 %v2082
        %v2084 = vpop.f32.mrb[0].mxu0
        %v2085 = vadd.f32 %v1956, %v2084
        %v2086 = vpop.f32.mrb[0].mxu0
        %2087 = vmatprep.mubr.f32.mxu0 0.0
        %v2088 = vand.u32 %v1176, 4294901760
        %2089 = vmatmul.mubr.f32.gmra.mrb[0].mxu0 %v2088
        %v2090 = vpop.f32.mrb[0].mxu0
        %v2091 = vadd.f32 %v1962, %v2090
        %v2092 = vpop.f32.mrb[0].mxu0
        %2093 = vmatprep.mubr.f32.mxu0 0.0
        %v2094 = vand.u32 %v1177, 4294901760
        %2095 = vmatmul.mubr.f32.gmra.mrb[0].mxu0 %v2094
        %v2096 = vpop.f32.mrb[0].mxu0
        %v2097 = vadd.f32 %v1968, %v2096
        %v2098 = vpop.f32.mrb[0].mxu0
        %2099 = vmatprep.mubr.f32.mxu0 0.0
        %v2100 = vand.u32 %v1178, 4294901760
        %2101 = vmatmul.mubr.f32.gmra.mrb[0].mxu0 %v2100
        %v2102 = vpop.f32.mrb[0].mxu0
        %v2103 = vadd.f32 %v1974, %v2102
        %v2104 = vpop.f32.mrb[0].mxu0
        %2105 = vmatprep.mubr.f32.mxu0 0.0
        %v2106 = vand.u32 %v1179, 4294901760
        %2107 = vmatmul.mubr.f32.gmra.mrb[0].mxu0 %v2106
        %v2108 = vpop.f32.mrb[0].mxu0
        %v2109 = vadd.f32 %v1980, %v2108
        %v2110 = vpop.f32.mrb[0].mxu0
        %2111 = vmatprep.mubr.f32.mxu0 0.0
        %v2112 = vand.u32 %v1180, 4294901760
        %2113 = vmatmul.mubr.f32.gmra.mrb[0].mxu0 %v2112
        %v2114 = vpop.f32.mrb[0].mxu0
        %v2115 = vadd.f32 %v1986, %v2114
        %v2116 = vpop.f32.mrb[0].mxu0
        %2117 = vmatprep.mubr.f32.mxu0 0.0
        %v2118 = vand.u32 %v1181, 4294901760
        %2119 = vmatmul.mubr.f32.gmra.mrb[0].mxu0 %v2118
        %v2120 = vpop.f32.mrb[0].mxu0
        %v2121 = vadd.f32 %v1992, %v2120
        %v2122 = vpop.f32.mrb[0].mxu0
        %2123 = vdwg.mxu0
        %v2124 = vmul.f32 %v1129, 0.03125
        %v2125 = vmul.f32 %v1135, 0.03125
        %v2126 = vmul.f32 %v1141, 0.03125
        %v2127 = vmul.f32 %v1147, 0.03125
        %v2128 = vmul.f32 %v1153, 0.03125
        %v2129 = vmul.f32 %v1159, 0.03125
        %v2130 = vmul.f32 %v1165, 0.03125
        %v2131 = vmul.f32 %v1171, 0.03125
        %v2132 = vmul.f32 %v2079, 0.03125
        %v2133 = vmul.f32 %v2085, 0.03125
        %v2134 = vmul.f32 %v2091, 0.03125
        %v2135 = vmul.f32 %v2097, 0.03125
        %v2136 = vmul.f32 %v2103, 0.03125
        %v2137 = vmul.f32 %v2109, 0.03125
        %v2138 = vmul.f32 %v2115, 0.03125
        %v2139 = vmul.f32 %v2121, 0.03125
        %v2140 = vmul.f32 %v2124, %v2124
        %v2141 = vmul.f32 %v2125, %v2125
        %v2142 = vmul.f32 %v2126, %v2126
        %v2143 = vmul.f32 %v2127, %v2127
        %v2144 = vmul.f32 %v2128, %v2128
        %v2145 = vmul.f32 %v2129, %v2129
        %v2146 = vmul.f32 %v2130, %v2130
        %v2147 = vmul.f32 %v2131, %v2131
        %v2148 = vsub.f32 %v2132, %v2140
        %v2149 = vsub.f32 %v2133, %v2141
        %v2150 = vsub.f32 %v2134, %v2142
        %v2151 = vsub.f32 %v2135, %v2143
        %v2152 = vsub.f32 %v2136, %v2144
        %v2153 = vsub.f32 %v2137, %v2145
        %v2154 = vsub.f32 %v2138, %v2146
        %v2155 = vsub.f32 %v2139, %v2147
        %v2156 = vmax.f32 %v2148, 0.0
        %v2157 = vmax.f32 %v2149, 0.0
        %v2158 = vmax.f32 %v2150, 0.0
        %v2159 = vmax.f32 %v2151, 0.0
        %v2160 = vmax.f32 %v2152, 0.0
        %v2161 = vmax.f32 %v2153, 0.0
        %v2162 = vmax.f32 %v2154, 0.0
        %v2163 = vmax.f32 %v2155, 0.0
        %v2164 = vadd.f32 %v2156, 1e-05
        %v2165 = vadd.f32 %v2157, 1e-05
        %v2166 = vadd.f32 %v2158, 1e-05
        %v2167 = vadd.f32 %v2159, 1e-05
        %v2168 = vadd.f32 %v2160, 1e-05
        %v2169 = vadd.f32 %v2161, 1e-05
        %v2170 = vadd.f32 %v2162, 1e-05
        %v2171 = vadd.f32 %v2163, 1e-05
        %v2172 = vrsqrt.pop %v2164
        %v2173 = vrsqrt.pop %v2165
        %v2174 = vrsqrt.pop %v2166
        %v2175 = vrsqrt.pop %v2167
        %v2176 = vrsqrt.pop %v2168
        %v2177 = vrsqrt.pop %v2169
        %v2178 = vrsqrt.pop %v2170
        %v2179 = vrsqrt.pop %v2171
        %v2180 = vsub.f32 %v206, %v2124
        %v2181 = vsub.f32 %v207, %v2125
        %v2182 = vsub.f32 %v208, %v2126
        %v2183 = vsub.f32 %v209, %v2127
        %v2184 = vsub.f32 %v210, %v2128
        %v2185 = vsub.f32 %v211, %v2129
        %v2186 = vsub.f32 %v212, %v2130
        %v2187 = vsub.f32 %v213, %v2131
        %v2188 = vmul.f32 %v2180, %v2172
        %v2189 = vmul.f32 %v2181, %v2173
        %v2190 = vmul.f32 %v2182, %v2174
        %v2191 = vmul.f32 %v2183, %v2175
        %v2192 = vmul.f32 %v2184, %v2176
        %v2193 = vmul.f32 %v2185, %v2177
        %v2194 = vmul.f32 %v2186, %v2178
        %v2195 = vmul.f32 %v2187, %v2179
        %v2196 = vlaneseq
        %v2197 = vshrl.u32 %v2196, 7
        %v2198 = vsub.s32 0, %v2197
        %v2199 = vrot.slane %v230, %v2198
        %v2200 = vmul.f32 %v2188, %v2199
        %v2201 = vmul.f32 %v2189, %v2199
        %v2202 = vmul.f32 %v2190, %v2199
        %v2203 = vmul.f32 %v2191, %v2199
        %v2204 = vmul.f32 %v2192, %v2199
        %v2205 = vmul.f32 %v2193, %v2199
        %v2206 = vmul.f32 %v2194, %v2199
        %v2207 = vmul.f32 %v2195, %v2199
        %v2208 = vlaneseq
        %v2209 = vshrl.u32 %v2208, 7
        %v2210 = vsub.s32 0, %v2209
        %v2211 = vrot.slane %v231, %v2210
        %v2212 = vadd.f32 %v2200, %v2211
        %v2213 = vadd.f32 %v2201, %v2211
        %v2214 = vadd.f32 %v2202, %v2211
        %v2215 = vadd.f32 %v2203, %v2211
        %v2216 = vadd.f32 %v2204, %v2211
        %v2217 = vadd.f32 %v2205, %v2211
        %v2218 = vadd.f32 %v2206, %v2211
        %v2219 = vadd.f32 %v2207, %v2211
        %2220 = vst [vmem:[%s203] sm:$0xff] %v2212
        %2221 = vst [vmem:[%s203 + $0x8] sm:$0xff] %v2213
        %2222 = vst [vmem:[%s203 + $0x10] sm:$0xff] %v2214
        %2223 = vst [vmem:[%s203 + $0x18] sm:$0xff] %v2215
        %2224 = vst [vmem:[%s203 + $0x20] sm:$0xff] %v2216
        %2225 = vst [vmem:[%s203 + $0x28] sm:$0xff] %v2217
        %2226 = vst [vmem:[%s203 + $0x30] sm:$0xff] %v2218
        %2227 = vst [vmem:[%s203 + $0x38] sm:$0xff] %v2219
        %s2228 = sand.u32 %s97, 1
        %s2229 = scalar_lea.sflag [#allocation4], %s2228
        %s2230 = sand.u32 %s97, 1
        %s2231 = smul.addr %s2230, 64
        %s2232 = scalar_lea.vmem [#allocation7], %s2231
        // Predicated region
        $region41: #{tpu_custom_call.1} parent=31 // pred_check
          %p2233 = pneg %p107
        $region42: #{tpu_custom_call.1} parent=31 // pred_check_branch
          %2235 = sbr.rel (%p2233) target = $region44
        $region43: #{tpu_custom_call.1} parent=31 // pred_region
          %s2236 = smul.u32 8, %s21
          %s2238 = ssub.s32 1024, 1024
          %2239 = vsyncadd %s2229, %s2238
          %s2240 = smul.addr %s2236, 128
          %s2241 = scalar_lea.hbm %s3, %s2240
          %s2242 = sshll.u32 %s2232, 4
          %s2243 = int_to_ptr.vmem [resolvable:$true] %s2242
          %2248 = dma.vmem_to_hbm [thread:$0]  %s2243, 1024, %s2241, %s2229, 128, 128, 8
        $region44: #{tpu_custom_call.1} parent=31 // pred_fallthru
          _
      $region32: #{tpu_custom_call.1} parent=5 // pred_fallthru
        _
      %p2249 = scmp.le.s32.totalorder 2, %s16
      // Predicated region
      $region45: #{tpu_custom_call.1} parent=5 // pred_check
        %p2250 = pneg %p2249
      $region46: #{tpu_custom_call.1} parent=5 // pred_check_branch
        %2252 = sbr.rel (%p2250) target = $region48
      $region47: #{tpu_custom_call.1} parent=5 // pred_region
        %s2253 = ssub.s32 %s16, 2
        // Predicated region
        $region49: #{tpu_custom_call.1} parent=47 // pred_check
          %p2254 = pneg %p113
        $region50: #{tpu_custom_call.1} parent=47 // pred_check_branch
          %2256 = sbr.rel (%p2254) target = $region52
        $region51: #{tpu_custom_call.1} parent=47 // pred_region
          %s2257 = sand.u32 %s98, 1
          %s2258 = scalar_lea.sflag [#allocation4], %s2257
          %s2259 = sand.u32 %s98, 1
          %s2260 = smul.addr %s2259, 64
          %s2261 = scalar_lea.vmem [#allocation7], %s2260
          %2262 = dma.done %s2258, 1024
        $region52: #{tpu_custom_call.1} parent=47 // pred_fallthru
          _
      $region48: #{tpu_custom_call.1} parent=5 // pred_fallthru
        _
    $region6: #{tpu_custom_call.1} parent=1 // loop_footer
      %s20 = sadd.s32 1, %s16
    $region7: #{tpu_custom_call.1} parent=1 // loop_footer_branch
      %15 = sbr.rel target = $region3
    $region8: #{tpu_custom_call.1} parent=1 // loop_exit
      _
    %2263 = vsyncpa [#allocation3], 1
    %s2264 = scalar_lea.sflag [#allocation3], 1
    %2265 = vsyncpa %s2264, 1
    %2266 = vsyncpa [#allocation6], 1
    %2267 = vsyncpa [#allocation4], 1
    %s2268 = scalar_lea.sflag [#allocation4], 1
    %2269 = vsyncpa %s2268, 1

</llo_original>
